<compile_context>
chip_gen: v6e
topology: v6e:2x2x1
jax: 0.10.0
libtpu: 0.0.40
codegen_flags: <defaults>
</compile_context>

<pallas_src>
import functools

import jax
import jax.numpy as jnp
from jax.experimental import pallas as pl
from jax.experimental.pallas import tpu as pltpu

LAYERS = [2, 40, 40, 1]
_LANE = 128


def _round_up(v, m):
    return ((v + m - 1) // m) * m


# ---------------------------------------------------------------------------
# Pallas kernel: whole MLP forward for one (8, TB) feature-major batch tile,
# processed in register-resident `chunk`-lane pieces.
# ---------------------------------------------------------------------------
def _mlp_kernel(x_ref, w1a_ref, w2_ref, b2_ref, w3t_ref, b3_ref, o_ref,
                *, chunk, n_chunks):
    # x:   (8, TB)    rows = [x0, x1, 1, 0, 0, 0, 0, 0]
    # w1a: (40, 8)    columns = [w1 | b1 | 0...]   (bias folded via ones row)
    # w2:  (40, 40)   b2: (40, 1)
    # w3t: (40, 1)    b3: (1, 1)     o: (1, TB)
    dot = functools.partial(jnp.dot, preferred_element_type=jnp.float32,
                            precision=jax.lax.Precision.HIGHEST)

    # Tiny VMEM-resident weights: load once per tile.
    w1a = w1a_ref[...]
    w2 = w2_ref[...]
    b2 = b2_ref[...]
    w3t = w3t_ref[...]
    b3 = b3_ref[...]

    # Trace-time fully-unrolled chunk loop (equivalent to
    # lax.fori_loop(..., unroll=True)): static slice starts -> free views,
    # h1/h2 stay in vregs (~10 vregs each at chunk=256) instead of
    # round-tripping 40 x TB f32 intermediates through VMEM.
    for c in range(n_chunks):
        sl = pl.ds(c * chunk, chunk)
        xc = x_ref[:, sl]                                   # (8, chunk)

        # Layer 1 (+ bias) entirely on the MXU via the augmented weight.
        h1 = jnp.tanh(dot(w1a, xc))                         # (40, chunk)

        # Layer 2: the real 40x40 matmul on the MXU, f32-accurate.
        h2 = jnp.tanh(dot(w2, h1) + b2)                     # (40, chunk)

        # Layer 3 (40 -> 1): VPU multiply + cross-sublane reduce (XLU).
        out = jnp.sum(w3t * h2, axis=0, keepdims=True) + b3  # (1, chunk)
        o_ref[:, sl] = out.astype(o_ref.dtype)


# ---------------------------------------------------------------------------
# Wrapper: build the augmented feature-major input once, tile over the batch
# (lane) axis with >= 2 parallel grid steps whenever possible, no explicit
# padding (partial boundary blocks are masked by Pallas).
# ---------------------------------------------------------------------------
@functools.partial(jax.jit, static_argnames=("tile_b", "chunk"))
def dnn_forward(x, params, *, tile_b=8192, chunk=256):
    """Forward pass of the [2, 40, 40, 1] tanh MLP.  x: (N, 2) -> (N, 1)."""
    (w1, b1), (w2, b2), (w3, b3) = params
    n = x.shape[0]
    d_h = w1.shape[0]
    dt = x.dtype

    # Augmented feature-major input: batch on the 128-lane axis.
    x_aug = jnp.concatenate(
        [x.T, jnp.ones((1, n), dt), jnp.zeros((5, n), dt)], axis=0)   # (8, n)

    # Augmented layer-1 weight: [w1 | b1 | zeros] -> (40, 8).
    w1a = jnp.concatenate(
        [w1, b1[:, None], jnp.zeros((d_h, 5), dt)], axis=1)
    b2c = b2[:, None]                    # (40, 1)
    w3t = w3.T                           # (40, 1)
    b3c = b3.reshape(1, 1)               # (1, 1)

    # Batch tile: large (amortize grid-step overhead) but capped at ~half the
    # lane-aligned batch so the grid has >= 2 parallel steps (v7x megacore).
    n_lanes = _round_up(n, _LANE)
    cap = _round_up(n_lanes // 2, _LANE) if n_lanes >= 2 * _LANE else _LANE
    tile = max(_LANE, min(_round_up(tile_b, _LANE), cap))

    chunk = min(chunk, tile)
    if tile % chunk:
        chunk = _LANE                    # 128 always divides a lane-aligned tile
    n_chunks = tile // chunk

    grid = (pl.cdiv(n, tile),)           # last block may be partial (masked)
    const = lambda i: (0, 0)
    kernel = functools.partial(_mlp_kernel, chunk=chunk, n_chunks=n_chunks)

    out_t = pl.pallas_call(
        kernel,
        out_shape=jax.ShapeDtypeStruct((1, n), dt),
        grid_spec=pl.GridSpec(
            grid=grid,
            in_specs=[
                pl.BlockSpec((8, tile), lambda i: (0, i)),   # x_aug (streamed)
                pl.BlockSpec((d_h, 8), const),               # w1 augmented
                pl.BlockSpec((d_h, d_h), const),             # w2 (40, 40)
                pl.BlockSpec((d_h, 1), const),               # b2 (40, 1)
                pl.BlockSpec((d_h, 1), const),               # w3^T (40, 1)
                pl.BlockSpec((1, 1), const),                 # b3 (1, 1)
            ],
            out_specs=pl.BlockSpec((1, tile), lambda i: (0, i)),
        ),
        compiler_params=pltpu.CompilerParams(
            # independent batch tiles -> shard across TensorCores on v7x
            dimension_semantics=("parallel",),
        ),
    )(x_aug, w1a, w2, b2c, w3t, b3c)

    return out_t.T                                           # (N, 1)


# ---------------------------------------------------------------------------
# Deterministic parameter init mirroring the PyTorch module:
#   weights: xavier_uniform_ (gain=1), stored (out, in) like nn.Linear
#   biases : nn.Linear default U(-1/sqrt(fan_in), 1/sqrt(fan_in)), stored (out,)
# ---------------------------------------------------------------------------
def init_params(key, layers, dtype=jnp.float32):
    params = []
    for i in range(len(layers) - 1):
        fan_in, fan_out = layers[i], layers[i + 1]
        key, kw, kb = jax.random.split(key, 3)
        bound_w = (6.0 / (fan_in + fan_out)) ** 0.5
        w = jax.random.uniform(kw, (fan_out, fan_in), dtype,
                               minval=-bound_w, maxval=bound_w)
        bound_b = 1.0 / (fan_in ** 0.5)
        b = jax.random.uniform(kb, (fan_out,), dtype,
                               minval=-bound_b, maxval=bound_b)
        params.append((w, b))
    return tuple(params)


def reference_forward(x, params):
    (w1, b1), (w2, b2), (w3, b3) = params
    dot = functools.partial(jnp.dot, precision=jax.lax.Precision.HIGHEST)
    h = jnp.tanh(dot(x, w1.T) + b1)
    h = jnp.tanh(dot(h, w2.T) + b2)
    return dot(h, w3.T) + b3


if __name__ == "__main__":
    key = jax.random.PRNGKey(0)
    kp, kx1, kx2 = jax.random.split(key, 3)

    params = init_params(kp, LAYERS)

    # Small batch of 2-D collocation points in [-2, 2]^2 (the PINN domain).
    # N=300 is not a multiple of 128: exercises the masked partial last block
    # and the >= 2-step parallel grid (tile clamps to 256 -> grid of 2).
    n1 = 300
    x1 = jax.random.uniform(kx1, (n1, LAYERS[0]), jnp.float32,
                            minval=-2.0, maxval=2.0)
    ref1 = reference_forward(x1, params)
    out1 = jax.block_until_ready(dnn_forward(x1, params))
    assert out1.shape == (n1, 1), out1.shape
    assert jnp.allclose(out1, ref1, atol=1e-3, rtol=1e-3), \
        float(jnp.max(jnp.abs(out1 - ref1)))

    # Larger batch: multi-chunk inner loop (tile 1536, 6 chunks of 256),
    # 2 parallel grid steps, masked partial last block.
    n2 = 3000
    x2 = jax.random.uniform(kx2, (n2, LAYERS[0]), jnp.float32,
                            minval=-2.0, maxval=2.0)
    ref2 = reference_forward(x2, params)
    out2 = jax.block_until_ready(dnn_forward(x2, params))
    assert out2.shape == (n2, 1), out2.shape
    assert jnp.allclose(out2, ref2, atol=1e-3, rtol=1e-3), \
        float(jnp.max(jnp.abs(out2 - ref2)))

    # Explicit small tile: exercises the tile/chunk specialization path
    # (tile 512, 2 chunks per tile, 6 grid steps).
    out3 = jax.block_until_ready(dnn_forward(x2, params, tile_b=512))
    assert jnp.allclose(out3, ref2, atol=1e-3, rtol=1e-3), \
        float(jnp.max(jnp.abs(out3 - ref2)))

    print("KERNEL_OK")
</pallas_src>

<mosaic_0001>
module attributes {stable_mosaic.version = 11 : i64} {
  func.func @_mlp_kernel(%arg0: i32, %arg1: memref<8x256xf32, #tpu.memory_space<vmem>>, %arg2: memref<40x8xf32, #tpu.memory_space<vmem>>, %arg3: memref<40x40xf32, #tpu.memory_space<vmem>>, %arg4: memref<40x1xf32, #tpu.memory_space<vmem>>, %arg5: memref<40x1xf32, #tpu.memory_space<vmem>>, %arg6: memref<1x1xf32, #tpu.memory_space<vmem>>, %arg7: memref<1x256xf32, #tpu.memory_space<vmem>>) attributes {dimension_semantics = [#tpu.dimension_semantics<parallel>], iteration_bounds = array<i64: 2>, scalar_prefetch = 0 : i64, scratch_operands = 0 : i64, tpu.core_type = #tpu.core_type<tc>, window_params = [{transform_indices = @transform_0, window_bounds = array<i64: 8, 256>}, {pipeline_mode = #tpu.pipeline_mode<synchronous>, transform_indices = @transform_1, window_bounds = array<i64: 40, 8>}, {pipeline_mode = #tpu.pipeline_mode<synchronous>, transform_indices = @transform_2, window_bounds = array<i64: 40, 40>}, {pipeline_mode = #tpu.pipeline_mode<synchronous>, transform_indices = @transform_3, window_bounds = array<i64: 40, 1>}, {pipeline_mode = #tpu.pipeline_mode<synchronous>, transform_indices = @transform_4, window_bounds = array<i64: 40, 1>}, {pipeline_mode = #tpu.pipeline_mode<synchronous>, transform_indices = @transform_5, window_bounds = array<i64: 1, 1>}, {transform_indices = @transform_6, window_bounds = array<i64: 1, 256>}]} {
    %c0 = arith.constant 0 : index
    %c0_0 = arith.constant 0 : index
    %0 = vector.load %arg2[%c0, %c0_0] : memref<40x8xf32, #tpu.memory_space<vmem>>, vector<40x8xf32>
    %c0_1 = arith.constant 0 : index
    %c0_2 = arith.constant 0 : index
    %1 = vector.load %arg3[%c0_1, %c0_2] : memref<40x40xf32, #tpu.memory_space<vmem>>, vector<40x40xf32>
    %c0_3 = arith.constant 0 : index
    %c0_4 = arith.constant 0 : index
    %2 = vector.load %arg4[%c0_3, %c0_4] : memref<40x1xf32, #tpu.memory_space<vmem>>, vector<40x1xf32>
    %c0_5 = arith.constant 0 : index
    %c0_6 = arith.constant 0 : index
    %3 = vector.load %arg5[%c0_5, %c0_6] : memref<40x1xf32, #tpu.memory_space<vmem>>, vector<40x1xf32>
    %c0_7 = arith.constant 0 : index
    %c0_8 = arith.constant 0 : index
    %4 = vector.load %arg6[%c0_7, %c0_8] : memref<1x1xf32, #tpu.memory_space<vmem>>, vector<1x1xf32>
    %c0_9 = arith.constant 0 : index
    %c0_10 = arith.constant 0 : index
    %5 = vector.load %arg1[%c0_9, %c0_10] : memref<8x256xf32, #tpu.memory_space<vmem>>, vector<8x256xf32>
    %cst = arith.constant dense<0.000000e+00> : vector<40x256xf32>
    %6 = tpu.matmul %0, %5, %cst {dimension_numbers = #tpu.dot_dimension_numbers<[1], [0], [0], [1], [0, 0, 1, 1], [], []>, precision = #tpu.contract_precision<fp32>} : vector<40x8xf32>, vector<8x256xf32>, vector<40x256xf32> -> vector<40x256xf32>
    %7 = math.tanh %6 : vector<40x256xf32>
    %cst_11 = arith.constant dense<0.000000e+00> : vector<40x256xf32>
    %8 = tpu.matmul %1, %7, %cst_11 {dimension_numbers = #tpu.dot_dimension_numbers<[1], [0], [0], [1], [0, 0, 1, 1], [], []>, precision = #tpu.contract_precision<fp32>} : vector<40x40xf32>, vector<40x256xf32>, vector<40x256xf32> -> vector<40x256xf32>
    %9 = vector.broadcast %2 : vector<40x1xf32> to vector<40x256xf32>
    %10 = arith.addf %8, %9 : vector<40x256xf32>
    %11 = math.tanh %10 : vector<40x256xf32>
    %12 = vector.broadcast %3 : vector<40x1xf32> to vector<40x256xf32>
    %13 = arith.mulf %12, %11 : vector<40x256xf32>
    %cst_12 = arith.constant dense<0.000000e+00> : vector<256xf32>
    %14 = vector.multi_reduction <add>, %13, %cst_12 [0] : vector<40x256xf32> to vector<256xf32>
    %15 = vector.shape_cast %14 : vector<256xf32> to vector<1x256xf32>
    %16 = vector.broadcast %4 : vector<1x1xf32> to vector<1x256xf32>
    %17 = arith.addf %15, %16 : vector<1x256xf32>
    %c0_13 = arith.constant 0 : index
    %c0_14 = arith.constant 0 : index
    %18 = vector.load %arg7[%c0_13, %c0_14] : memref<1x256xf32, #tpu.memory_space<vmem>>, vector<1x256xf32>
    tpu.vector_store %arg7[%c0_13, %c0_14], %17 {strides = array<i32>} : memref<1x256xf32, #tpu.memory_space<vmem>>, vector<1x256xf32>,
    return
  }
  func.func @transform_0(%arg0: i32) -> (i32, i32) {
    %c0_i32 = arith.constant 0 : i32
    %c0_i32_0 = arith.constant 0 : i32
    return %c0_i32, %arg0 : i32, i32
  }
  func.func @transform_1(%arg0: i32) -> (i32, i32) {
    %c0_i32 = arith.constant 0 : i32
    %c0_i32_0 = arith.constant 0 : i32
    %c0_i32_1 = arith.constant 0 : i32
    return %c0_i32, %c0_i32_0 : i32, i32
  }
  func.func @transform_2(%arg0: i32) -> (i32, i32) {
    %c0_i32 = arith.constant 0 : i32
    %c0_i32_0 = arith.constant 0 : i32
    %c0_i32_1 = arith.constant 0 : i32
    return %c0_i32, %c0_i32_0 : i32, i32
  }
  func.func @transform_3(%arg0: i32) -> (i32, i32) {
    %c0_i32 = arith.constant 0 : i32
    %c0_i32_0 = arith.constant 0 : i32
    %c0_i32_1 = arith.constant 0 : i32
    return %c0_i32, %c0_i32_0 : i32, i32
  }
  func.func @transform_4(%arg0: i32) -> (i32, i32) {
    %c0_i32 = arith.constant 0 : i32
    %c0_i32_0 = arith.constant 0 : i32
    %c0_i32_1 = arith.constant 0 : i32
    return %c0_i32, %c0_i32_0 : i32, i32
  }
  func.func @transform_5(%arg0: i32) -> (i32, i32) {
    %c0_i32 = arith.constant 0 : i32
    %c0_i32_0 = arith.constant 0 : i32
    %c0_i32_1 = arith.constant 0 : i32
    return %c0_i32, %c0_i32_0 : i32, i32
  }
  func.func @transform_6(%arg0: i32) -> (i32, i32) {
    %c0_i32 = arith.constant 0 : i32
    %c0_i32_0 = arith.constant 0 : i32
    return %c0_i32, %arg0 : i32, i32
  }
}

</mosaic_0001>

<llo_original>
// kernel: dnn_forward.1
$region0: #{dnn_forward.1}
  #allocation0 [shape = 'u32[]', space=smem, size = 0x4, offset = 0x4, fixed_abs, tag = 'smem constant byte address 0x4 - core index']
  #allocation1 [shape = 'u32[144,128]{1,0:T(1,128)}', space=vmem, size = 0x12000, scoped, tag = 'internal scratch']
  #allocation2 [shape = 'f32[1,1]{1,0:T(1,128)S(1)}', space=vmem, size = 0x200, scoped, tag = 'scoped memory for dnn_forward.1']
  %s0 = inlined_call_operand.vmem [shape: f32[8,300], index: 0, kind: input, shape index: {}]
  %s1 = inlined_call_operand.vmem [shape: f32[40,8], index: 1, kind: input, shape index: {}]
  %s2 = inlined_call_operand.vmem [shape: f32[40,40], index: 2, kind: input, shape index: {}]
  %s3 = inlined_call_operand.vmem [shape: f32[40,1], index: 3, kind: input, shape index: {}]
  %s4 = inlined_call_operand.vmem [shape: f32[40,1], index: 4, kind: input, shape index: {}]
  %s5 = inlined_call_operand.<no memory space> [shape: f32[1,1], index: 5, kind: input, shape index: {}]
  %s6 = inlined_call_operand.hbm [shape: f32[1,300], index: 6, kind: output, shape index: {}]
  %s7 = sld [smem:[#allocation0]]
  $region57: #{dnn_forward.1} parent=0
    _
  %s9 = ssub.s32 1, %s7
  %s10 = scalar_select 0, %s9, %s7
  %v11 = vstv %s5
  %12 = vst [vmem:[#allocation2] sm:$0x1] %v11
  $region1: #{dnn_forward.1} parent=0
    #allocation3 [shape = 'u8[2048]{0}', space=vmem, size = 0x800, scoped, tag = 'output window, operand 0']
    #allocation4 [shape = 's32[2]{0}', space=sflag, size = 0x8, scoped, tag = 'scoped memory for dnn_forward.1']
    %13 = vsyncpa [#allocation4], 0
    %s14 = scalar_lea.sflag [#allocation4], 1
    %15 = vsyncpa %s14, 0
    loop: start=0, step=1, limit=4
    $region2: #{dnn_forward.1} parent=1 // loop_pre_header
      _
    $region3: #{dnn_forward.1} parent=1 // loop_header
      %s17 = sphi 0, %s21
      %p18 = scmp.ge.s32.totalorder %s17, 4
      %s27 = sphi 0, %s29
      %s30 = sphi 0, %s27
      %s31 = sphi 0, %s30
      %s47 = sphi 0, %s31
      %s51 = sphi 0, %s51
      %s53 = sphi 0, %s51
      %s54 = sphi 0, %s53
      %s68 = sphi 0, %s54
      %s72 = sphi 0, %s72
      %s74 = sphi 0, %s72
      %s75 = sphi 0, %s74
      %s89 = sphi 0, %s75
      %s93 = sphi 0, %s93
      %s95 = sphi 0, %s93
      %s96 = sphi 0, %s95
      %s110 = sphi 0, %s96
      %s114 = sphi 0, %s114
      %s116 = sphi 0, %s114
      %s117 = sphi 0, %s116
      %s131 = sphi 0, %s117
      %s135 = sphi 0, %s135
      %s137 = sphi 0, %s135
      %s138 = sphi 0, %s137
      %s152 = sphi 0, %s138
      %s158 = sphi 0, %s160
      %s161 = sphi 0, %s158
      %s162 = sphi 0, %s161
      %s178 = sphi 0, %s162
    $region4: #{dnn_forward.1} parent=1 // loop_header_branch
      %20 = sbr.rel (%p18) target = $region8
    $region5: #{dnn_forward.1} parent=1 // loop_body
      %s22 = ssub.s32 %s17, 1
      %s23 = ssub.s32 %s17, 2
      %s24 = sadd.s32 %s17, 1
      %s25 = ssub.s32 %s17, %s24
      %p26 = scmp.eq.s32.totalorder %s25, 0
      %s28 = sadd.s32 %s27, 1
      %s29 = scalar_select %p26, %s27, %s28
      %p32 = pneg %p26
      %p33 = scmp.eq.s32.totalorder %s17, 1
      %p34 = por %p32, %p33
      %p35 = scmp.ne.s32.totalorder %s27, %s30
      %p36 = scmp.eq.s32.totalorder %s17, 0
      %p37 = por %p35, %p36
      %p38 = scmp.ne.s32.totalorder %s27, %s30
      %p39 = scmp.eq.s32.totalorder %s22, 1
      %p40 = por %p38, %p39
      %p41 = scmp.ne.s32.totalorder %s30, %s31
      %p42 = scmp.eq.s32.totalorder %s22, 0
      %p43 = por %p41, %p42
      %p44 = scmp.ne.s32.totalorder %s30, %s31
      %p45 = scmp.eq.s32.totalorder %s23, 1
      %p46 = por %p44, %p45
      %p48 = scmp.ne.s32.totalorder %s31, %s47
      %p49 = scmp.eq.s32.totalorder %s23, 0
      %p50 = por %p48, %p49
      %s52 = sadd.s32 %s51, 1
      %p55 = scmp.eq.s32.totalorder %s17, 1
      %p56 = scmp.ne.s32.totalorder %s51, %s53
      %p57 = scmp.eq.s32.totalorder %s17, 0
      %p58 = por %p56, %p57
      %p59 = scmp.ne.s32.totalorder %s51, %s53
      %p60 = scmp.eq.s32.totalorder %s22, 1
      %p61 = por %p59, %p60
      %p62 = scmp.ne.s32.totalorder %s53, %s54
      %p63 = scmp.eq.s32.totalorder %s22, 0
      %p64 = por %p62, %p63
      %p65 = scmp.ne.s32.totalorder %s53, %s54
      %p66 = scmp.eq.s32.totalorder %s23, 1
      %p67 = por %p65, %p66
      %p69 = scmp.ne.s32.totalorder %s54, %s68
      %p70 = scmp.eq.s32.totalorder %s23, 0
      %p71 = por %p69, %p70
      %s73 = sadd.s32 %s72, 1
      %p76 = scmp.eq.s32.totalorder %s17, 1
      %p77 = scmp.ne.s32.totalorder %s72, %s74
      %p78 = scmp.eq.s32.totalorder %s17, 0
      %p79 = por %p77, %p78
      %p80 = scmp.ne.s32.totalorder %s72, %s74
      %p81 = scmp.eq.s32.totalorder %s22, 1
      %p82 = por %p80, %p81
      %p83 = scmp.ne.s32.totalorder %s74, %s75
      %p84 = scmp.eq.s32.totalorder %s22, 0
      %p85 = por %p83, %p84
      %p86 = scmp.ne.s32.totalorder %s74, %s75
      %p87 = scmp.eq.s32.totalorder %s23, 1
      %p88 = por %p86, %p87
      %p90 = scmp.ne.s32.totalorder %s75, %s89
      %p91 = scmp.eq.s32.totalorder %s23, 0
      %p92 = por %p90, %p91
      %s94 = sadd.s32 %s93, 1
      %p97 = scmp.eq.s32.totalorder %s17, 1
      %p98 = scmp.ne.s32.totalorder %s93, %s95
      %p99 = scmp.eq.s32.totalorder %s17, 0
      %p100 = por %p98, %p99
      %p101 = scmp.ne.s32.totalorder %s93, %s95
      %p102 = scmp.eq.s32.totalorder %s22, 1
      %p103 = por %p101, %p102
      %p104 = scmp.ne.s32.totalorder %s95, %s96
      %p105 = scmp.eq.s32.totalorder %s22, 0
      %p106 = por %p104, %p105
      %p107 = scmp.ne.s32.totalorder %s95, %s96
      %p108 = scmp.eq.s32.totalorder %s23, 1
      %p109 = por %p107, %p108
      %p111 = scmp.ne.s32.totalorder %s96, %s110
      %p112 = scmp.eq.s32.totalorder %s23, 0
      %p113 = por %p111, %p112
      %s115 = sadd.s32 %s114, 1
      %p118 = scmp.eq.s32.totalorder %s17, 1
      %p119 = scmp.ne.s32.totalorder %s114, %s116
      %p120 = scmp.eq.s32.totalorder %s17, 0
      %p121 = por %p119, %p120
      %p122 = scmp.ne.s32.totalorder %s114, %s116
      %p123 = scmp.eq.s32.totalorder %s22, 1
      %p124 = por %p122, %p123
      %p125 = scmp.ne.s32.totalorder %s116, %s117
      %p126 = scmp.eq.s32.totalorder %s22, 0
      %p127 = por %p125, %p126
      %p128 = scmp.ne.s32.totalorder %s116, %s117
      %p129 = scmp.eq.s32.totalorder %s23, 1
      %p130 = por %p128, %p129
      %p132 = scmp.ne.s32.totalorder %s117, %s131
      %p133 = scmp.eq.s32.totalorder %s23, 0
      %p134 = por %p132, %p133
      %s136 = sadd.s32 %s135, 1
      %p139 = scmp.eq.s32.totalorder %s17, 1
      %p140 = scmp.ne.s32.totalorder %s135, %s137
      %p141 = scmp.eq.s32.totalorder %s17, 0
      %p142 = por %p140, %p141
      %p143 = scmp.ne.s32.totalorder %s135, %s137
      %p144 = scmp.eq.s32.totalorder %s22, 1
      %p145 = por %p143, %p144
      %p146 = scmp.ne.s32.totalorder %s137, %s138
      %p147 = scmp.eq.s32.totalorder %s22, 0
      %p148 = por %p146, %p147
      %p149 = scmp.ne.s32.totalorder %s137, %s138
      %p150 = scmp.eq.s32.totalorder %s23, 1
      %p151 = por %p149, %p150
      %p153 = scmp.ne.s32.totalorder %s138, %s152
      %p154 = scmp.eq.s32.totalorder %s23, 0
      %p155 = por %p153, %p154
      %s156 = ssub.s32 %s17, %s24
      %p157 = scmp.eq.s32.totalorder %s156, 0
      %s159 = sadd.s32 %s158, 1
      %s160 = scalar_select %p157, %s158, %s159
      %p163 = pneg %p157
      %p164 = scmp.eq.s32.totalorder %s17, 1
      %p165 = por %p163, %p164
      %p166 = scmp.ne.s32.totalorder %s158, %s161
      %p167 = scmp.eq.s32.totalorder %s17, 0
      %p168 = por %p166, %p167
      %p169 = scmp.ne.s32.totalorder %s158, %s161
      %p170 = scmp.eq.s32.totalorder %s22, 1
      %p171 = por %p169, %p170
      %p172 = scmp.ne.s32.totalorder %s161, %s162
      %p173 = scmp.eq.s32.totalorder %s22, 0
      %p174 = por %p172, %p173
      %p175 = scmp.ne.s32.totalorder %s161, %s162
      %p176 = scmp.eq.s32.totalorder %s23, 1
      %p177 = por %p175, %p176
      %p179 = scmp.ne.s32.totalorder %s162, %s178
      %p180 = scmp.eq.s32.totalorder %s23, 0
      %p181 = por %p179, %p180
      %p182 = scmp.le.s32.totalorder 1, %s17
      %p183 = scmp.lt.s32.totalorder %s17, 3
      %p184 = pnand %p182, %p183
      %p185 = pneg %p184
      // Predicated region
      $region9: #{dnn_forward.1} parent=5 // pred_check
        _
      $region10: #{dnn_forward.1} parent=5 // pred_check_branch
        %187 = sbr.rel (%p184) target = $region12
      $region11: #{dnn_forward.1} parent=5 // pred_region
        %s188 = ssub.s32 %s17, 1
        // Predicated region
        $region13: #{dnn_forward.1} parent=11 // pred_check
          %p189 = pneg %p64
        $region14: #{dnn_forward.1} parent=11 // pred_check_branch
          %191 = sbr.rel (%p189) target = $region16
        $region15: #{dnn_forward.1} parent=11 // pred_region
          _
        $region16: #{dnn_forward.1} parent=11 // pred_fallthru
          _
        // Predicated region
        $region17: #{dnn_forward.1} parent=11 // pred_check
          %p192 = pneg %p85
        $region18: #{dnn_forward.1} parent=11 // pred_check_branch
          %194 = sbr.rel (%p192) target = $region20
        $region19: #{dnn_forward.1} parent=11 // pred_region
          _
        $region20: #{dnn_forward.1} parent=11 // pred_fallthru
          _
        // Predicated region
        $region21: #{dnn_forward.1} parent=11 // pred_check
          %p195 = pneg %p106
        $region22: #{dnn_forward.1} parent=11 // pred_check_branch
          %197 = sbr.rel (%p195) target = $region24
        $region23: #{dnn_forward.1} parent=11 // pred_region
          _
        $region24: #{dnn_forward.1} parent=11 // pred_fallthru
          _
        // Predicated region
        $region25: #{dnn_forward.1} parent=11 // pred_check
          %p198 = pneg %p127
        $region26: #{dnn_forward.1} parent=11 // pred_check_branch
          %200 = sbr.rel (%p198) target = $region28
        $region27: #{dnn_forward.1} parent=11 // pred_region
          _
        $region28: #{dnn_forward.1} parent=11 // pred_fallthru
          _
        // Predicated region
        $region29: #{dnn_forward.1} parent=11 // pred_check
          %p201 = pneg %p148
        $region30: #{dnn_forward.1} parent=11 // pred_check_branch
          %203 = sbr.rel (%p201) target = $region32
        $region31: #{dnn_forward.1} parent=11 // pred_region
          _
        $region32: #{dnn_forward.1} parent=11 // pred_fallthru
          _
      $region12: #{dnn_forward.1} parent=5 // pred_fallthru
        _
      %p204 = scmp.lt.s32.totalorder %s17, 2
      // Predicated region
      $region33: #{dnn_forward.1} parent=5 // pred_check
        %p205 = pneg %p204
      $region34: #{dnn_forward.1} parent=5 // pred_check_branch
        %207 = sbr.rel (%p205) target = $region36
      $region35: #{dnn_forward.1} parent=5 // pred_region
        // Predicated region
        $region37: #{dnn_forward.1} parent=35 // pred_check
          %p208 = pneg %p37
        $region38: #{dnn_forward.1} parent=35 // pred_check_branch
          %210 = sbr.rel (%p208) target = $region40
        $region39: #{dnn_forward.1} parent=35 // pred_region
          %s211 = smul.u32 2, %s17
          %s212 = ssub.s32 3, %s211
          %p213 = scmp.lt.s32.totalorder %s212, 2
          %s214 = scalar_select %p213, %s212, 2
          %s215 = smul.u32 128, %s214
          %p216 = scmp.lt.s32.totalorder %s211, 2
          %s217 = scalar_select %p216, %s211, 2
          %s218 = smul.addr %s217, 8
          %s219 = scalar_lea.vmem %s0, %s218
          %s220 = smul.u32 2, %s17
          %s221 = ssub.s32 3, %s220
          %p222 = scmp.lt.s32.totalorder %s221, 2
          %s223 = scalar_select %p222, %s221, 2
          %s224 = smul.u32 128, %s223
        $region40: #{dnn_forward.1} parent=35 // pred_fallthru
          _
      $region36: #{dnn_forward.1} parent=5 // pred_fallthru
        _
      %p225 = scmp.le.s32.totalorder 1, %s17
      %p226 = scmp.lt.s32.totalorder %s17, 3
      %p227 = pnand %p225, %p226
      %p228 = pneg %p227
      // Predicated region
      $region41: #{dnn_forward.1} parent=5 // pred_check
        _
      $region42: #{dnn_forward.1} parent=5 // pred_check_branch
        %230 = sbr.rel (%p227) target = $region44
      $region43: #{dnn_forward.1} parent=5 // pred_region
        %s231 = ssub.s32 %s17, 1
        %s232 = smul.u32 2, %s22
        %s233 = ssub.s32 3, %s232
        %p234 = scmp.lt.s32.totalorder %s233, 2
        %s235 = scalar_select %p234, %s233, 2
        %s236 = smul.u32 128, %s235
        %p237 = scmp.lt.s32.totalorder %s232, 2
        %s238 = scalar_select %p237, %s232, 2
        %s239 = smul.addr %s238, 8
        %s240 = scalar_lea.vmem %s0, %s239
        %p241 = pneg %p43
        %p242 = pneg %p40
        %p243 = pneg %p64
        %p244 = pneg %p61
        %p245 = pneg %p85
        %p246 = pneg %p82
        %p247 = pneg %p106
        %p248 = pneg %p103
        %p249 = pneg %p127
        %p250 = pneg %p124
        %p251 = pneg %p148
        %p252 = pneg %p145
        %p253 = pneg %p174
        %p254 = pneg %p171
        %s255 = sand.u32 %s161, 1
        %s256 = scalar_lea.sflag [#allocation4], %s255
        %s257 = sand.u32 %s161, 1
        %s258 = smul.addr %s257, 2
        %s259 = scalar_lea.vmem [#allocation3], %s258
        %s260 = smul.u32 2, %s22
        %s261 = ssub.s32 3, %s260
        %p262 = scmp.lt.s32.totalorder %s261, 2
        %s263 = scalar_select %p262, %s261, 2
        %s264 = smul.u32 128, %s263
        %p265 = scmp.lt.s32.totalorder %s260, 2
        %s266 = scalar_select %p265, %s260, 2
        %s267 = smul.addr %s266, 8
        %s268 = scalar_lea.vmem %s0, %s267
        %s269 = smul.u32 2, %s22
        %s270 = ssub.s32 3, %s269
        %p271 = scmp.lt.s32.totalorder %s270, 2
        %s272 = scalar_select %p271, %s270, 2
        %s273 = smul.u32 128, %s272
        %s274 = smul.u32 2, %s22
        %s275 = ssub.s32 3, %s274
        %p276 = scmp.lt.s32.totalorder %s275, 2
        %s277 = scalar_select %p276, %s275, 2
        %s278 = smul.u32 16, %s277
        %v279 = vld [vmem:[%s1] sm:$0xff]
        %v280 = vld [vmem:[%s1 + $0x8] sm:$0xff]
        %v281 = vld [vmem:[%s1 + $0x10] sm:$0xff]
        %v282 = vld [vmem:[%s1 + $0x18] sm:$0xff]
        %v283 = vld [vmem:[%s1 + $0x20] sm:$0xff]
        %v284 = vld [vmem:[%s2] sm:$0xff]
        %v285 = vld [vmem:[%s2 + $0x8] sm:$0xff]
        %v286 = vld [vmem:[%s2 + $0x10] sm:$0xff]
        %v287 = vld [vmem:[%s2 + $0x18] sm:$0xff]
        %v288 = vld [vmem:[%s2 + $0x20] sm:$0xff]
        %v289 = vld [vmem:[%s3] sm:$0xff]
        %v290 = vld [vmem:[%s3 + $0x8] sm:$0xff]
        %v291 = vld [vmem:[%s3 + $0x10] sm:$0xff]
        %v292 = vld [vmem:[%s3 + $0x18] sm:$0xff]
        %v293 = vld [vmem:[%s3 + $0x20] sm:$0xff]
        %v294 = vld [vmem:[%s4] sm:$0xff]
        %v295 = vld [vmem:[%s4 + $0x8] sm:$0xff]
        %v296 = vld [vmem:[%s4 + $0x10] sm:$0xff]
        %v297 = vld [vmem:[%s4 + $0x18] sm:$0xff]
        %v298 = vld [vmem:[%s4 + $0x20] sm:$0xff]
        %v299 = vld [vmem:[#allocation2] sm:$0x1]
        %v300 = vld [vmem:[%s268] sm:$0xff]
        %v301 = vld [vmem:[%s268 + $0x8] sm:$0xff]
        %vm302 = vcmask 64512
        %v304 = vsel %vm302, %v279, 0
        %v307 = vsel %vm302, %v280, 0
        %v310 = vsel %vm302, %v281, 0
        %v313 = vsel %vm302, %v282, 0
        %v316 = vsel %vm302, %v283, 0
        %318 = vmatprep.subr.mxu0 0.0
        %319 = vmatpush1.msra.mxu0 0.0
        %320 = vmatprep.subr.mxu0 0.0
        %321 = vmatpush1.msra.mxu0 0.0
        %322 = vmatprep.subr.mxu0 0.0
        %323 = vmatpush1.msra.mxu0 0.0
        %324 = vmatprep.subr.mxu0 0.0
        %325 = vmatpush1.msra.mxu0 0.0
        %326 = vmatprep.subr.mxu0 0.0
        %327 = vmatpush1.msra.mxu0 0.0
        %328 = vmatprep.subr.mxu0 0.0
        %329 = vmatpush1.msra.mxu0 0.0
        %330 = vmatprep.subr.mxu0 0.0
        %331 = vmatpush1.msra.mxu0 0.0
        %332 = vmatprep.subr.mxu0 0.0
        %333 = vmatpush1.msra.mxu0 0.0
        %334 = vmatprep.subr.mxu0 0.0
        %335 = vmatpush1.msra.mxu0 0.0
        %336 = vmatprep.subr.mxu0 0.0
        %337 = vmatpush1.msra.mxu0 0.0
        %338 = vmatprep.subr.mxu0 0.0
        %339 = vmatpush1.msra.mxu0 0.0
        %340 = vmatprep.subr.mxu0 0.0
        %341 = vmatpush1.msra.mxu0 0.0
        %342 = vmatprep.subr.mxu0 0.0
        %343 = vmatpush1.msra.mxu0 0.0
        %344 = vmatprep.subr.mxu0 0.0
        %345 = vmatpush1.msra.mxu0 0.0
        %346 = vmatprep.subr.mxu0 0.0
        %347 = vmatpush1.msra.mxu0 0.0
        %v348 = vand.u32 %v301, 4294901760
        %349 = vmatprep.subr.mxu0 %v348
        %v350 = vand.u32 %v300, 4294901760
        %351 = vmatpush1.msra.mxu0 %v350
        %352 = vmatprep.subr.mxu0 0.0
        %353 = vmatpush2.msra.mxu0 0.0
        %354 = vmatprep.subr.mxu0 0.0
        %355 = vmatpush2.msra.mxu0 0.0
        %356 = vmatprep.subr.mxu0 0.0
        %357 = vmatpush2.msra.mxu0 0.0
        %358 = vmatprep.subr.mxu0 0.0
        %359 = vmatpush2.msra.mxu0 0.0
        %360 = vmatprep.subr.mxu0 0.0
        %361 = vmatpush2.msra.mxu0 0.0
        %362 = vmatprep.subr.mxu0 0.0
        %363 = vmatpush2.msra.mxu0 0.0
        %364 = vmatprep.subr.mxu0 0.0
        %365 = vmatpush2.msra.mxu0 0.0
        %366 = vmatprep.subr.mxu0 0.0
        %367 = vmatpush2.msra.mxu0 0.0
        %368 = vmatprep.subr.mxu0 0.0
        %369 = vmatpush2.msra.mxu0 0.0
        %370 = vmatprep.subr.mxu0 0.0
        %371 = vmatpush2.msra.mxu0 0.0
        %372 = vmatprep.subr.mxu0 0.0
        %373 = vmatpush2.msra.mxu0 0.0
        %374 = vmatprep.subr.mxu0 0.0
        %375 = vmatpush2.msra.mxu0 0.0
        %376 = vmatprep.subr.mxu0 0.0
        %377 = vmatpush2.msra.mxu0 0.0
        %378 = vmatprep.subr.mxu0 0.0
        %379 = vmatpush2.msra.mxu0 0.0
        %380 = vmatprep.subr.mxu0 0.0
        %381 = vmatpush2.msra.mxu0 0.0
        %382 = vmatprep.subr.mxu0 0.0
        %383 = vmatpush2.msra.mxu0 0.0
        %384 = vmatprep.mubr.f32.mxu0 0.0
        %v385 = vand.u32 %v304, 4294901760
        %v386 = vsub.f32 %v304, %v385
        %v387 = vand.u32 %v386, 4294901760
        %v388 = vsub.f32 %v386, %v387
        %v389 = vand.u32 %v388, 4294901760
        %390 = vmatmul.mubr.f32.gmra.mxu0 %v389
        %v391 = vpop.f32.mrf.mxu0
        %v392 = vadd.f32 0.0, %v391
        %v393 = vpop.f32.mrf.mxu0
        %v394 = vadd.f32 0.0, %v393
        %395 = vmatprep.mubr.f32.mxu0 0.0
        %v396 = vand.u32 %v307, 4294901760
        %v397 = vsub.f32 %v307, %v396
        %v398 = vand.u32 %v397, 4294901760
        %v399 = vsub.f32 %v397, %v398
        %v400 = vand.u32 %v399, 4294901760
        %401 = vmatmul.mubr.f32.gmra.mxu0 %v400
        %v402 = vpop.f32.mrf.mxu0
        %v403 = vadd.f32 0.0, %v402
        %v404 = vpop.f32.mrf.mxu0
        %v405 = vadd.f32 0.0, %v404
        %406 = vmatprep.mubr.f32.mxu0 0.0
        %v407 = vand.u32 %v310, 4294901760
        %v408 = vsub.f32 %v310, %v407
        %v409 = vand.u32 %v408, 4294901760
        %v410 = vsub.f32 %v408, %v409
        %v411 = vand.u32 %v410, 4294901760
        %412 = vmatmul.mubr.f32.gmra.mxu0 %v411
        %v413 = vpop.f32.mrf.mxu0
        %v414 = vadd.f32 0.0, %v413
        %v415 = vpop.f32.mrf.mxu0
        %v416 = vadd.f32 0.0, %v415
        %417 = vmatprep.mubr.f32.mxu0 0.0
        %v418 = vand.u32 %v313, 4294901760
        %v419 = vsub.f32 %v313, %v418
        %v420 = vand.u32 %v419, 4294901760
        %v421 = vsub.f32 %v419, %v420
        %v422 = vand.u32 %v421, 4294901760
        %423 = vmatmul.mubr.f32.gmra.mxu0 %v422
        %v424 = vpop.f32.mrf.mxu0
        %v425 = vadd.f32 0.0, %v424
        %v426 = vpop.f32.mrf.mxu0
        %v427 = vadd.f32 0.0, %v426
        %428 = vmatprep.mubr.f32.mxu0 0.0
        %v429 = vand.u32 %v316, 4294901760
        %v430 = vsub.f32 %v316, %v429
        %v431 = vand.u32 %v430, 4294901760
        %v432 = vsub.f32 %v430, %v431
        %v433 = vand.u32 %v432, 4294901760
        %434 = vmatmul.mubr.f32.gmra.mxu0 %v433
        %v435 = vpop.f32.mrf.mxu0
        %v436 = vadd.f32 0.0, %v435
        %v437 = vpop.f32.mrf.mxu0
        %v438 = vadd.f32 0.0, %v437
        %439 = vdwg.mxu0
        %440 = vmatprep.subr.mxu0 0.0
        %441 = vmatpush1.msra.mxu0 0.0
        %442 = vmatprep.subr.mxu0 0.0
        %443 = vmatpush1.msra.mxu0 0.0
        %444 = vmatprep.subr.mxu0 0.0
        %445 = vmatpush1.msra.mxu0 0.0
        %446 = vmatprep.subr.mxu0 0.0
        %447 = vmatpush1.msra.mxu0 0.0
        %448 = vmatprep.subr.mxu0 0.0
        %449 = vmatpush1.msra.mxu0 0.0
        %450 = vmatprep.subr.mxu0 0.0
        %451 = vmatpush1.msra.mxu0 0.0
        %452 = vmatprep.subr.mxu0 0.0
        %453 = vmatpush1.msra.mxu0 0.0
        %454 = vmatprep.subr.mxu0 0.0
        %455 = vmatpush1.msra.mxu0 0.0
        %456 = vmatprep.subr.mxu0 0.0
        %457 = vmatpush1.msra.mxu0 0.0
        %458 = vmatprep.subr.mxu0 0.0
        %459 = vmatpush1.msra.mxu0 0.0
        %460 = vmatprep.subr.mxu0 0.0
        %461 = vmatpush1.msra.mxu0 0.0
        %462 = vmatprep.subr.mxu0 0.0
        %463 = vmatpush1.msra.mxu0 0.0
        %464 = vmatprep.subr.mxu0 0.0
        %465 = vmatpush1.msra.mxu0 0.0
        %466 = vmatprep.subr.mxu0 0.0
        %467 = vmatpush1.msra.mxu0 0.0
        %468 = vmatprep.subr.mxu0 0.0
        %469 = vmatpush1.msra.mxu0 0.0
        %v470 = vand.u32 %v301, 4294901760
        %v471 = vsub.f32 %v301, %v470
        %v472 = vand.u32 %v471, 4294901760
        %v473 = vsub.f32 %v471, %v472
        %v474 = vand.u32 %v473, 4294901760
        %475 = vmatprep.subr.mxu0 %v474
        %v476 = vand.u32 %v300, 4294901760
        %v477 = vsub.f32 %v300, %v476
        %v478 = vand.u32 %v477, 4294901760
        %v479 = vsub.f32 %v477, %v478
        %v480 = vand.u32 %v479, 4294901760
        %481 = vmatpush1.msra.mxu0 %v480
        %482 = vmatprep.subr.mxu0 0.0
        %483 = vmatpush2.msra.mxu0 0.0
        %484 = vmatprep.subr.mxu0 0.0
        %485 = vmatpush2.msra.mxu0 0.0
        %486 = vmatprep.subr.mxu0 0.0
        %487 = vmatpush2.msra.mxu0 0.0
        %488 = vmatprep.subr.mxu0 0.0
        %489 = vmatpush2.msra.mxu0 0.0
        %490 = vmatprep.subr.mxu0 0.0
        %491 = vmatpush2.msra.mxu0 0.0
        %492 = vmatprep.subr.mxu0 0.0
        %493 = vmatpush2.msra.mxu0 0.0
        %494 = vmatprep.subr.mxu0 0.0
        %495 = vmatpush2.msra.mxu0 0.0
        %496 = vmatprep.subr.mxu0 0.0
        %497 = vmatpush2.msra.mxu0 0.0
        %498 = vmatprep.subr.mxu0 0.0
        %499 = vmatpush2.msra.mxu0 0.0
        %500 = vmatprep.subr.mxu0 0.0
        %501 = vmatpush2.msra.mxu0 0.0
        %502 = vmatprep.subr.mxu0 0.0
        %503 = vmatpush2.msra.mxu0 0.0
        %504 = vmatprep.subr.mxu0 0.0
        %505 = vmatpush2.msra.mxu0 0.0
        %506 = vmatprep.subr.mxu0 0.0
        %507 = vmatpush2.msra.mxu0 0.0
        %508 = vmatprep.subr.mxu0 0.0
        %509 = vmatpush2.msra.mxu0 0.0
        %510 = vmatprep.subr.mxu0 0.0
        %511 = vmatpush2.msra.mxu0 0.0
        %512 = vmatprep.subr.mxu0 0.0
        %513 = vmatpush2.msra.mxu0 0.0
        %514 = vmatprep.mubr.f32.mxu0 0.0
        %v515 = vand.u32 %v304, 4294901760
        %516 = vmatmul.mubr.f32.gmra.mxu0 %v515
        %v517 = vpop.f32.mrf.mxu0
        %v518 = vadd.f32 %v392, %v517
        %v519 = vpop.f32.mrf.mxu0
        %v520 = vadd.f32 %v394, %v519
        %521 = vmatprep.mubr.f32.mxu0 0.0
        %v522 = vand.u32 %v307, 4294901760
        %523 = vmatmul.mubr.f32.gmra.mxu0 %v522
        %v524 = vpop.f32.mrf.mxu0
        %v525 = vadd.f32 %v403, %v524
        %v526 = vpop.f32.mrf.mxu0
        %v527 = vadd.f32 %v405, %v526
        %528 = vmatprep.mubr.f32.mxu0 0.0
        %v529 = vand.u32 %v310, 4294901760
        %530 = vmatmul.mubr.f32.gmra.mxu0 %v529
        %v531 = vpop.f32.mrf.mxu0
        %v532 = vadd.f32 %v414, %v531
        %v533 = vpop.f32.mrf.mxu0
        %v534 = vadd.f32 %v416, %v533
        %535 = vmatprep.mubr.f32.mxu0 0.0
        %v536 = vand.u32 %v313, 4294901760
        %537 = vmatmul.mubr.f32.gmra.mxu0 %v536
        %v538 = vpop.f32.mrf.mxu0
        %v539 = vadd.f32 %v425, %v538
        %v540 = vpop.f32.mrf.mxu0
        %v541 = vadd.f32 %v427, %v540
        %542 = vmatprep.mubr.f32.mxu0 0.0
        %v543 = vand.u32 %v316, 4294901760
        %544 = vmatmul.mubr.f32.gmra.mxu0 %v543
        %v545 = vpop.f32.mrf.mxu0
        %v546 = vadd.f32 %v436, %v545
        %v547 = vpop.f32.mrf.mxu0
        %v548 = vadd.f32 %v438, %v547
        %549 = vdwg.mxu0
        %550 = vmatprep.subr.mxu0 0.0
        %551 = vmatpush1.msra.mxu0 0.0
        %552 = vmatprep.subr.mxu0 0.0
        %553 = vmatpush1.msra.mxu0 0.0
        %554 = vmatprep.subr.mxu0 0.0
        %555 = vmatpush1.msra.mxu0 0.0
        %556 = vmatprep.subr.mxu0 0.0
        %557 = vmatpush1.msra.mxu0 0.0
        %558 = vmatprep.subr.mxu0 0.0
        %559 = vmatpush1.msra.mxu0 0.0
        %560 = vmatprep.subr.mxu0 0.0
        %561 = vmatpush1.msra.mxu0 0.0
        %562 = vmatprep.subr.mxu0 0.0
        %563 = vmatpush1.msra.mxu0 0.0
        %564 = vmatprep.subr.mxu0 0.0
        %565 = vmatpush1.msra.mxu0 0.0
        %566 = vmatprep.subr.mxu0 0.0
        %567 = vmatpush1.msra.mxu0 0.0
        %568 = vmatprep.subr.mxu0 0.0
        %569 = vmatpush1.msra.mxu0 0.0
        %570 = vmatprep.subr.mxu0 0.0
        %571 = vmatpush1.msra.mxu0 0.0
        %572 = vmatprep.subr.mxu0 0.0
        %573 = vmatpush1.msra.mxu0 0.0
        %574 = vmatprep.subr.mxu0 0.0
        %575 = vmatpush1.msra.mxu0 0.0
        %576 = vmatprep.subr.mxu0 0.0
        %577 = vmatpush1.msra.mxu0 0.0
        %578 = vmatprep.subr.mxu0 0.0
        %579 = vmatpush1.msra.mxu0 0.0
        %v580 = vand.u32 %v301, 4294901760
        %v581 = vsub.f32 %v301, %v580
        %582 = vmatprep.subr.mxu0 %v581
        %v583 = vand.u32 %v300, 4294901760
        %v584 = vsub.f32 %v300, %v583
        %585 = vmatpush1.msra.mxu0 %v584
        %586 = vmatprep.subr.mxu0 0.0
        %587 = vmatpush2.msra.mxu0 0.0
        %588 = vmatprep.subr.mxu0 0.0
        %589 = vmatpush2.msra.mxu0 0.0
        %590 = vmatprep.subr.mxu0 0.0
        %591 = vmatpush2.msra.mxu0 0.0
        %592 = vmatprep.subr.mxu0 0.0
        %593 = vmatpush2.msra.mxu0 0.0
        %594 = vmatprep.subr.mxu0 0.0
        %595 = vmatpush2.msra.mxu0 0.0
        %596 = vmatprep.subr.mxu0 0.0
        %597 = vmatpush2.msra.mxu0 0.0
        %598 = vmatprep.subr.mxu0 0.0
        %599 = vmatpush2.msra.mxu0 0.0
        %600 = vmatprep.subr.mxu0 0.0
        %601 = vmatpush2.msra.mxu0 0.0
        %602 = vmatprep.subr.mxu0 0.0
        %603 = vmatpush2.msra.mxu0 0.0
        %604 = vmatprep.subr.mxu0 0.0
        %605 = vmatpush2.msra.mxu0 0.0
        %606 = vmatprep.subr.mxu0 0.0
        %607 = vmatpush2.msra.mxu0 0.0
        %608 = vmatprep.subr.mxu0 0.0
        %609 = vmatpush2.msra.mxu0 0.0
        %610 = vmatprep.subr.mxu0 0.0
        %611 = vmatpush2.msra.mxu0 0.0
        %612 = vmatprep.subr.mxu0 0.0
        %613 = vmatpush2.msra.mxu0 0.0
        %614 = vmatprep.subr.mxu0 0.0
        %615 = vmatpush2.msra.mxu0 0.0
        %616 = vmatprep.subr.mxu0 0.0
        %617 = vmatpush2.msra.mxu0 0.0
        %618 = vmatprep.mubr.f32.mxu0 0.0
        %v619 = vand.u32 %v304, 4294901760
        %v620 = vsub.f32 %v304, %v619
        %621 = vmatmul.mubr.f32.gmra.mxu0 %v620
        %v622 = vpop.f32.mrf.mxu0
        %v623 = vadd.f32 %v518, %v622
        %v624 = vpop.f32.mrf.mxu0
        %v625 = vadd.f32 %v520, %v624
        %626 = vmatprep.mubr.f32.mxu0 0.0
        %v627 = vand.u32 %v307, 4294901760
        %v628 = vsub.f32 %v307, %v627
        %629 = vmatmul.mubr.f32.gmra.mxu0 %v628
        %v630 = vpop.f32.mrf.mxu0
        %v631 = vadd.f32 %v525, %v630
        %v632 = vpop.f32.mrf.mxu0
        %v633 = vadd.f32 %v527, %v632
        %634 = vmatprep.mubr.f32.mxu0 0.0
        %v635 = vand.u32 %v310, 4294901760
        %v636 = vsub.f32 %v310, %v635
        %637 = vmatmul.mubr.f32.gmra.mxu0 %v636
        %v638 = vpop.f32.mrf.mxu0
        %v639 = vadd.f32 %v532, %v638
        %v640 = vpop.f32.mrf.mxu0
        %v641 = vadd.f32 %v534, %v640
        %642 = vmatprep.mubr.f32.mxu0 0.0
        %v643 = vand.u32 %v313, 4294901760
        %v644 = vsub.f32 %v313, %v643
        %645 = vmatmul.mubr.f32.gmra.mxu0 %v644
        %v646 = vpop.f32.mrf.mxu0
        %v647 = vadd.f32 %v539, %v646
        %v648 = vpop.f32.mrf.mxu0
        %v649 = vadd.f32 %v541, %v648
        %650 = vmatprep.mubr.f32.mxu0 0.0
        %v651 = vand.u32 %v316, 4294901760
        %v652 = vsub.f32 %v316, %v651
        %653 = vmatmul.mubr.f32.gmra.mxu0 %v652
        %v654 = vpop.f32.mrf.mxu0
        %v655 = vadd.f32 %v546, %v654
        %v656 = vpop.f32.mrf.mxu0
        %v657 = vadd.f32 %v548, %v656
        %658 = vdwg.mxu0
        %659 = vmatprep.subr.mxu0 0.0
        %660 = vmatpush1.msra.mxu0 0.0
        %661 = vmatprep.subr.mxu0 0.0
        %662 = vmatpush1.msra.mxu0 0.0
        %663 = vmatprep.subr.mxu0 0.0
        %664 = vmatpush1.msra.mxu0 0.0
        %665 = vmatprep.subr.mxu0 0.0
        %666 = vmatpush1.msra.mxu0 0.0
        %667 = vmatprep.subr.mxu0 0.0
        %668 = vmatpush1.msra.mxu0 0.0
        %669 = vmatprep.subr.mxu0 0.0
        %670 = vmatpush1.msra.mxu0 0.0
        %671 = vmatprep.subr.mxu0 0.0
        %672 = vmatpush1.msra.mxu0 0.0
        %673 = vmatprep.subr.mxu0 0.0
        %674 = vmatpush1.msra.mxu0 0.0
        %675 = vmatprep.subr.mxu0 0.0
        %676 = vmatpush1.msra.mxu0 0.0
        %677 = vmatprep.subr.mxu0 0.0
        %678 = vmatpush1.msra.mxu0 0.0
        %679 = vmatprep.subr.mxu0 0.0
        %680 = vmatpush1.msra.mxu0 0.0
        %681 = vmatprep.subr.mxu0 0.0
        %682 = vmatpush1.msra.mxu0 0.0
        %683 = vmatprep.subr.mxu0 0.0
        %684 = vmatpush1.msra.mxu0 0.0
        %685 = vmatprep.subr.mxu0 0.0
        %686 = vmatpush1.msra.mxu0 0.0
        %687 = vmatprep.subr.mxu0 0.0
        %688 = vmatpush1.msra.mxu0 0.0
        %v689 = vand.u32 %v301, 4294901760
        %690 = vmatprep.subr.mxu0 %v689
        %v691 = vand.u32 %v300, 4294901760
        %692 = vmatpush1.msra.mxu0 %v691
        %693 = vmatprep.subr.mxu0 0.0
        %694 = vmatpush2.msra.mxu0 0.0
        %695 = vmatprep.subr.mxu0 0.0
        %696 = vmatpush2.msra.mxu0 0.0
        %697 = vmatprep.subr.mxu0 0.0
        %698 = vmatpush2.msra.mxu0 0.0
        %699 = vmatprep.subr.mxu0 0.0
        %700 = vmatpush2.msra.mxu0 0.0
        %701 = vmatprep.subr.mxu0 0.0
        %702 = vmatpush2.msra.mxu0 0.0
        %703 = vmatprep.subr.mxu0 0.0
        %704 = vmatpush2.msra.mxu0 0.0
        %705 = vmatprep.subr.mxu0 0.0
        %706 = vmatpush2.msra.mxu0 0.0
        %707 = vmatprep.subr.mxu0 0.0
        %708 = vmatpush2.msra.mxu0 0.0
        %709 = vmatprep.subr.mxu0 0.0
        %710 = vmatpush2.msra.mxu0 0.0
        %711 = vmatprep.subr.mxu0 0.0
        %712 = vmatpush2.msra.mxu0 0.0
        %713 = vmatprep.subr.mxu0 0.0
        %714 = vmatpush2.msra.mxu0 0.0
        %715 = vmatprep.subr.mxu0 0.0
        %716 = vmatpush2.msra.mxu0 0.0
        %717 = vmatprep.subr.mxu0 0.0
        %718 = vmatpush2.msra.mxu0 0.0
        %719 = vmatprep.subr.mxu0 0.0
        %720 = vmatpush2.msra.mxu0 0.0
        %721 = vmatprep.subr.mxu0 0.0
        %722 = vmatpush2.msra.mxu0 0.0
        %723 = vmatprep.subr.mxu0 0.0
        %724 = vmatpush2.msra.mxu0 0.0
        %725 = vmatprep.mubr.f32.mxu0 0.0
        %v726 = vand.u32 %v304, 4294901760
        %v727 = vsub.f32 %v304, %v726
        %v728 = vand.u32 %v727, 4294901760
        %729 = vmatmul.mubr.f32.gmra.mxu0 %v728
        %v730 = vpop.f32.mrf.mxu0
        %v731 = vadd.f32 %v623, %v730
        %v732 = vpop.f32.mrf.mxu0
        %v733 = vadd.f32 %v625, %v732
        %734 = vmatprep.mubr.f32.mxu0 0.0
        %v735 = vand.u32 %v307, 4294901760
        %v736 = vsub.f32 %v307, %v735
        %v737 = vand.u32 %v736, 4294901760
        %738 = vmatmul.mubr.f32.gmra.mxu0 %v737
        %v739 = vpop.f32.mrf.mxu0
        %v740 = vadd.f32 %v631, %v739
        %v741 = vpop.f32.mrf.mxu0
        %v742 = vadd.f32 %v633, %v741
        %743 = vmatprep.mubr.f32.mxu0 0.0
        %v744 = vand.u32 %v310, 4294901760
        %v745 = vsub.f32 %v310, %v744
        %v746 = vand.u32 %v745, 4294901760
        %747 = vmatmul.mubr.f32.gmra.mxu0 %v746
        %v748 = vpop.f32.mrf.mxu0
        %v749 = vadd.f32 %v639, %v748
        %v750 = vpop.f32.mrf.mxu0
        %v751 = vadd.f32 %v641, %v750
        %752 = vmatprep.mubr.f32.mxu0 0.0
        %v753 = vand.u32 %v313, 4294901760
        %v754 = vsub.f32 %v313, %v753
        %v755 = vand.u32 %v754, 4294901760
        %756 = vmatmul.mubr.f32.gmra.mxu0 %v755
        %v757 = vpop.f32.mrf.mxu0
        %v758 = vadd.f32 %v647, %v757
        %v759 = vpop.f32.mrf.mxu0
        %v760 = vadd.f32 %v649, %v759
        %761 = vmatprep.mubr.f32.mxu0 0.0
        %v762 = vand.u32 %v316, 4294901760
        %v763 = vsub.f32 %v316, %v762
        %v764 = vand.u32 %v763, 4294901760
        %765 = vmatmul.mubr.f32.gmra.mxu0 %v764
        %v766 = vpop.f32.mrf.mxu0
        %v767 = vadd.f32 %v655, %v766
        %v768 = vpop.f32.mrf.mxu0
        %v769 = vadd.f32 %v657, %v768
        %770 = vdwg.mxu0
        %771 = vmatprep.subr.mxu0 0.0
        %772 = vmatpush1.msra.mxu0 0.0
        %773 = vmatprep.subr.mxu0 0.0
        %774 = vmatpush1.msra.mxu0 0.0
        %775 = vmatprep.subr.mxu0 0.0
        %776 = vmatpush1.msra.mxu0 0.0
        %777 = vmatprep.subr.mxu0 0.0
        %778 = vmatpush1.msra.mxu0 0.0
        %779 = vmatprep.subr.mxu0 0.0
        %780 = vmatpush1.msra.mxu0 0.0
        %781 = vmatprep.subr.mxu0 0.0
        %782 = vmatpush1.msra.mxu0 0.0
        %783 = vmatprep.subr.mxu0 0.0
        %784 = vmatpush1.msra.mxu0 0.0
        %785 = vmatprep.subr.mxu0 0.0
        %786 = vmatpush1.msra.mxu0 0.0
        %787 = vmatprep.subr.mxu0 0.0
        %788 = vmatpush1.msra.mxu0 0.0
        %789 = vmatprep.subr.mxu0 0.0
        %790 = vmatpush1.msra.mxu0 0.0
        %791 = vmatprep.subr.mxu0 0.0
        %792 = vmatpush1.msra.mxu0 0.0
        %793 = vmatprep.subr.mxu0 0.0
        %794 = vmatpush1.msra.mxu0 0.0
        %795 = vmatprep.subr.mxu0 0.0
        %796 = vmatpush1.msra.mxu0 0.0
        %797 = vmatprep.subr.mxu0 0.0
        %798 = vmatpush1.msra.mxu0 0.0
        %799 = vmatprep.subr.mxu0 0.0
        %800 = vmatpush1.msra.mxu0 0.0
        %v801 = vand.u32 %v301, 4294901760
        %v802 = vsub.f32 %v301, %v801
        %v803 = vand.u32 %v802, 4294901760
        %804 = vmatprep.subr.mxu0 %v803
        %v805 = vand.u32 %v300, 4294901760
        %v806 = vsub.f32 %v300, %v805
        %v807 = vand.u32 %v806, 4294901760
        %808 = vmatpush1.msra.mxu0 %v807
        %809 = vmatprep.subr.mxu0 0.0
        %810 = vmatpush2.msra.mxu0 0.0
        %811 = vmatprep.subr.mxu0 0.0
        %812 = vmatpush2.msra.mxu0 0.0
        %813 = vmatprep.subr.mxu0 0.0
        %814 = vmatpush2.msra.mxu0 0.0
        %815 = vmatprep.subr.mxu0 0.0
        %816 = vmatpush2.msra.mxu0 0.0
        %817 = vmatprep.subr.mxu0 0.0
        %818 = vmatpush2.msra.mxu0 0.0
        %819 = vmatprep.subr.mxu0 0.0
        %820 = vmatpush2.msra.mxu0 0.0
        %821 = vmatprep.subr.mxu0 0.0
        %822 = vmatpush2.msra.mxu0 0.0
        %823 = vmatprep.subr.mxu0 0.0
        %824 = vmatpush2.msra.mxu0 0.0
        %825 = vmatprep.subr.mxu0 0.0
        %826 = vmatpush2.msra.mxu0 0.0
        %827 = vmatprep.subr.mxu0 0.0
        %828 = vmatpush2.msra.mxu0 0.0
        %829 = vmatprep.subr.mxu0 0.0
        %830 = vmatpush2.msra.mxu0 0.0
        %831 = vmatprep.subr.mxu0 0.0
        %832 = vmatpush2.msra.mxu0 0.0
        %833 = vmatprep.subr.mxu0 0.0
        %834 = vmatpush2.msra.mxu0 0.0
        %835 = vmatprep.subr.mxu0 0.0
        %836 = vmatpush2.msra.mxu0 0.0
        %837 = vmatprep.subr.mxu0 0.0
        %838 = vmatpush2.msra.mxu0 0.0
        %839 = vmatprep.subr.mxu0 0.0
        %840 = vmatpush2.msra.mxu0 0.0
        %841 = vmatprep.mubr.f32.mxu0 0.0
        %v842 = vand.u32 %v304, 4294901760
        %843 = vmatmul.mubr.f32.gmra.mxu0 %v842
        %v844 = vpop.f32.mrf.mxu0
        %v845 = vadd.f32 %v731, %v844
        %v846 = vpop.f32.mrf.mxu0
        %v847 = vadd.f32 %v733, %v846
        %848 = vmatprep.mubr.f32.mxu0 0.0
        %v849 = vand.u32 %v307, 4294901760
        %850 = vmatmul.mubr.f32.gmra.mxu0 %v849
        %v851 = vpop.f32.mrf.mxu0
        %v852 = vadd.f32 %v740, %v851
        %v853 = vpop.f32.mrf.mxu0
        %v854 = vadd.f32 %v742, %v853
        %855 = vmatprep.mubr.f32.mxu0 0.0
        %v856 = vand.u32 %v310, 4294901760
        %857 = vmatmul.mubr.f32.gmra.mxu0 %v856
        %v858 = vpop.f32.mrf.mxu0
        %v859 = vadd.f32 %v749, %v858
        %v860 = vpop.f32.mrf.mxu0
        %v861 = vadd.f32 %v751, %v860
        %862 = vmatprep.mubr.f32.mxu0 0.0
        %v863 = vand.u32 %v313, 4294901760
        %864 = vmatmul.mubr.f32.gmra.mxu0 %v863
        %v865 = vpop.f32.mrf.mxu0
        %v866 = vadd.f32 %v758, %v865
        %v867 = vpop.f32.mrf.mxu0
        %v868 = vadd.f32 %v760, %v867
        %869 = vmatprep.mubr.f32.mxu0 0.0
        %v870 = vand.u32 %v316, 4294901760
        %871 = vmatmul.mubr.f32.gmra.mxu0 %v870
        %v872 = vpop.f32.mrf.mxu0
        %v873 = vadd.f32 %v767, %v872
        %v874 = vpop.f32.mrf.mxu0
        %v875 = vadd.f32 %v769, %v874
        %876 = vdwg.mxu0
        %877 = vmatprep.subr.mxu0 0.0
        %878 = vmatpush1.msra.mxu0 0.0
        %879 = vmatprep.subr.mxu0 0.0
        %880 = vmatpush1.msra.mxu0 0.0
        %881 = vmatprep.subr.mxu0 0.0
        %882 = vmatpush1.msra.mxu0 0.0
        %883 = vmatprep.subr.mxu0 0.0
        %884 = vmatpush1.msra.mxu0 0.0
        %885 = vmatprep.subr.mxu0 0.0
        %886 = vmatpush1.msra.mxu0 0.0
        %887 = vmatprep.subr.mxu0 0.0
        %888 = vmatpush1.msra.mxu0 0.0
        %889 = vmatprep.subr.mxu0 0.0
        %890 = vmatpush1.msra.mxu0 0.0
        %891 = vmatprep.subr.mxu0 0.0
        %892 = vmatpush1.msra.mxu0 0.0
        %893 = vmatprep.subr.mxu0 0.0
        %894 = vmatpush1.msra.mxu0 0.0
        %895 = vmatprep.subr.mxu0 0.0
        %896 = vmatpush1.msra.mxu0 0.0
        %897 = vmatprep.subr.mxu0 0.0
        %898 = vmatpush1.msra.mxu0 0.0
        %899 = vmatprep.subr.mxu0 0.0
        %900 = vmatpush1.msra.mxu0 0.0
        %901 = vmatprep.subr.mxu0 0.0
        %902 = vmatpush1.msra.mxu0 0.0
        %903 = vmatprep.subr.mxu0 0.0
        %904 = vmatpush1.msra.mxu0 0.0
        %905 = vmatprep.subr.mxu0 0.0
        %906 = vmatpush1.msra.mxu0 0.0
        %v907 = vand.u32 %v301, 4294901760
        %908 = vmatprep.subr.mxu0 %v907
        %v909 = vand.u32 %v300, 4294901760
        %910 = vmatpush1.msra.mxu0 %v909
        %911 = vmatprep.subr.mxu0 0.0
        %912 = vmatpush2.msra.mxu0 0.0
        %913 = vmatprep.subr.mxu0 0.0
        %914 = vmatpush2.msra.mxu0 0.0
        %915 = vmatprep.subr.mxu0 0.0
        %916 = vmatpush2.msra.mxu0 0.0
        %917 = vmatprep.subr.mxu0 0.0
        %918 = vmatpush2.msra.mxu0 0.0
        %919 = vmatprep.subr.mxu0 0.0
        %920 = vmatpush2.msra.mxu0 0.0
        %921 = vmatprep.subr.mxu0 0.0
        %922 = vmatpush2.msra.mxu0 0.0
        %923 = vmatprep.subr.mxu0 0.0
        %924 = vmatpush2.msra.mxu0 0.0
        %925 = vmatprep.subr.mxu0 0.0
        %926 = vmatpush2.msra.mxu0 0.0
        %927 = vmatprep.subr.mxu0 0.0
        %928 = vmatpush2.msra.mxu0 0.0
        %929 = vmatprep.subr.mxu0 0.0
        %930 = vmatpush2.msra.mxu0 0.0
        %931 = vmatprep.subr.mxu0 0.0
        %932 = vmatpush2.msra.mxu0 0.0
        %933 = vmatprep.subr.mxu0 0.0
        %934 = vmatpush2.msra.mxu0 0.0
        %935 = vmatprep.subr.mxu0 0.0
        %936 = vmatpush2.msra.mxu0 0.0
        %937 = vmatprep.subr.mxu0 0.0
        %938 = vmatpush2.msra.mxu0 0.0
        %939 = vmatprep.subr.mxu0 0.0
        %940 = vmatpush2.msra.mxu0 0.0
        %941 = vmatprep.subr.mxu0 0.0
        %942 = vmatpush2.msra.mxu0 0.0
        %943 = vmatprep.mubr.f32.mxu0 0.0
        %v944 = vand.u32 %v304, 4294901760
        %945 = vmatmul.mubr.f32.gmra.mxu0 %v944
        %v946 = vpop.f32.mrf.mxu0
        %v947 = vadd.f32 %v845, %v946
        %v948 = vpop.f32.mrf.mxu0
        %v949 = vadd.f32 %v847, %v948
        %950 = vmatprep.mubr.f32.mxu0 0.0
        %v951 = vand.u32 %v307, 4294901760
        %952 = vmatmul.mubr.f32.gmra.mxu0 %v951
        %v953 = vpop.f32.mrf.mxu0
        %v954 = vadd.f32 %v852, %v953
        %v955 = vpop.f32.mrf.mxu0
        %v956 = vadd.f32 %v854, %v955
        %957 = vmatprep.mubr.f32.mxu0 0.0
        %v958 = vand.u32 %v310, 4294901760
        %959 = vmatmul.mubr.f32.gmra.mxu0 %v958
        %v960 = vpop.f32.mrf.mxu0
        %v961 = vadd.f32 %v859, %v960
        %v962 = vpop.f32.mrf.mxu0
        %v963 = vadd.f32 %v861, %v962
        %964 = vmatprep.mubr.f32.mxu0 0.0
        %v965 = vand.u32 %v313, 4294901760
        %966 = vmatmul.mubr.f32.gmra.mxu0 %v965
        %v967 = vpop.f32.mrf.mxu0
        %v968 = vadd.f32 %v866, %v967
        %v969 = vpop.f32.mrf.mxu0
        %v970 = vadd.f32 %v868, %v969
        %971 = vmatprep.mubr.f32.mxu0 0.0
        %v972 = vand.u32 %v316, 4294901760
        %973 = vmatmul.mubr.f32.gmra.mxu0 %v972
        %v974 = vpop.f32.mrf.mxu0
        %v975 = vadd.f32 %v873, %v974
        %v976 = vpop.f32.mrf.mxu0
        %v977 = vadd.f32 %v875, %v976
        %978 = vdwg.mxu0
        %v979 = vtanh.pop %v947
        %v980 = vtanh.pop %v949
        %v981 = vtanh.pop %v954
        %v982 = vtanh.pop %v956
        %v983 = vtanh.pop %v961
        %v984 = vtanh.pop %v963
        %v985 = vtanh.pop %v968
        %v986 = vtanh.pop %v970
        %v987 = vtanh.pop %v975
        %v988 = vtanh.pop %v977
        %990 = vset.pattern.permute.xlu0 0
        %991 = vperm.xlu0 %990, %v289
        %v992 = vpop.permute.xlu0 %991
        %995 = vset.pattern.permute.xlu0 0
        %996 = vperm.xlu0 %995, %v290
        %v997 = vpop.permute.xlu0 %996
        %1000 = vset.pattern.permute.xlu0 0
        %1001 = vperm.xlu0 %1000, %v291
        %v1002 = vpop.permute.xlu0 %1001
        %1005 = vset.pattern.permute.xlu0 0
        %1006 = vperm.xlu0 %1005, %v292
        %v1007 = vpop.permute.xlu0 %1006
        %1010 = vset.pattern.permute.xlu0 0
        %1011 = vperm.xlu0 %1010, %v293
        %v1012 = vpop.permute.xlu0 %1011
        %vm1014 = vcmask 326656
        %v1016 = vsel %vm1014, %v284, 0
        %v1019 = vsel %vm1014, %v285, 0
        %v1022 = vsel %vm1014, %v286, 0
        %v1025 = vsel %vm1014, %v287, 0
        %v1028 = vsel %vm1014, %v288, 0
        %1030 = vmatprep.subr.mxu0 0.0
        %1031 = vmatpush1.msra.mxu0 0.0
        %1032 = vmatprep.subr.mxu0 0.0
        %1033 = vmatpush1.msra.mxu0 0.0
        %1034 = vmatprep.subr.mxu0 0.0
        %1035 = vmatpush1.msra.mxu0 0.0
        %1036 = vmatprep.subr.mxu0 0.0
        %1037 = vmatpush1.msra.mxu0 0.0
        %1038 = vmatprep.subr.mxu0 0.0
        %1039 = vmatpush1.msra.mxu0 0.0
        %1040 = vmatprep.subr.mxu0 0.0
        %1041 = vmatpush1.msra.mxu0 0.0
        %1042 = vmatprep.subr.mxu0 0.0
        %1043 = vmatpush1.msra.mxu0 0.0
        %1044 = vmatprep.subr.mxu0 0.0
        %1045 = vmatpush1.msra.mxu0 0.0
        %1046 = vmatprep.subr.mxu0 0.0
        %1047 = vmatpush1.msra.mxu0 0.0
        %1048 = vmatprep.subr.mxu0 0.0
        %1049 = vmatpush1.msra.mxu0 0.0
        %1050 = vmatprep.subr.mxu0 0.0
        %1051 = vmatpush1.msra.mxu0 0.0
        %v1052 = vand.u32 %v988, 4294901760
        %1053 = vmatprep.subr.mxu0 %v1052
        %v1054 = vand.u32 %v987, 4294901760
        %1055 = vmatpush1.msra.mxu0 %v1054
        %v1056 = vand.u32 %v986, 4294901760
        %1057 = vmatprep.subr.mxu0 %v1056
        %v1058 = vand.u32 %v985, 4294901760
        %1059 = vmatpush1.msra.mxu0 %v1058
        %v1060 = vand.u32 %v984, 4294901760
        %1061 = vmatprep.subr.mxu0 %v1060
        %v1062 = vand.u32 %v983, 4294901760
        %1063 = vmatpush1.msra.mxu0 %v1062
        %v1064 = vand.u32 %v982, 4294901760
        %1065 = vmatprep.subr.mxu0 %v1064
        %v1066 = vand.u32 %v981, 4294901760
        %1067 = vmatpush1.msra.mxu0 %v1066
        %v1068 = vand.u32 %v980, 4294901760
        %1069 = vmatprep.subr.mxu0 %v1068
        %v1070 = vand.u32 %v979, 4294901760
        %1071 = vmatpush1.msra.mxu0 %v1070
        %1072 = vmatprep.subr.mxu0 0.0
        %1073 = vmatpush2.msra.mxu0 0.0
        %1074 = vmatprep.subr.mxu0 0.0
        %1075 = vmatpush2.msra.mxu0 0.0
        %1076 = vmatprep.subr.mxu0 0.0
        %1077 = vmatpush2.msra.mxu0 0.0
        %1078 = vmatprep.subr.mxu0 0.0
        %1079 = vmatpush2.msra.mxu0 0.0
        %1080 = vmatprep.subr.mxu0 0.0
        %1081 = vmatpush2.msra.mxu0 0.0
        %1082 = vmatprep.subr.mxu0 0.0
        %1083 = vmatpush2.msra.mxu0 0.0
        %1084 = vmatprep.subr.mxu0 0.0
        %1085 = vmatpush2.msra.mxu0 0.0
        %1086 = vmatprep.subr.mxu0 0.0
        %1087 = vmatpush2.msra.mxu0 0.0
        %1088 = vmatprep.subr.mxu0 0.0
        %1089 = vmatpush2.msra.mxu0 0.0
        %1090 = vmatprep.subr.mxu0 0.0
        %1091 = vmatpush2.msra.mxu0 0.0
        %1092 = vmatprep.subr.mxu0 0.0
        %1093 = vmatpush2.msra.mxu0 0.0
        %1094 = vmatprep.subr.mxu0 0.0
        %1095 = vmatpush2.msra.mxu0 0.0
        %1096 = vmatprep.subr.mxu0 0.0
        %1097 = vmatpush2.msra.mxu0 0.0
        %1098 = vmatprep.subr.mxu0 0.0
        %1099 = vmatpush2.msra.mxu0 0.0
        %1100 = vmatprep.subr.mxu0 0.0
        %1101 = vmatpush2.msra.mxu0 0.0
        %1102 = vmatprep.subr.mxu0 0.0
        %1103 = vmatpush2.msra.mxu0 0.0
        %1104 = vmatprep.mubr.f32.mxu0 0.0
        %v1105 = vand.u32 %v1016, 4294901760
        %v1106 = vsub.f32 %v1016, %v1105
        %v1107 = vand.u32 %v1106, 4294901760
        %v1108 = vsub.f32 %v1106, %v1107
        %v1109 = vand.u32 %v1108, 4294901760
        %1110 = vmatmul.mubr.f32.gmra.mxu0 %v1109
        %v1111 = vpop.f32.mrf.mxu0
        %v1112 = vadd.f32 %v992, %v1111
        %v1113 = vpop.f32.mrf.mxu0
        %v1114 = vadd.f32 %v992, %v1113
        %1115 = vmatprep.mubr.f32.mxu0 0.0
        %v1116 = vand.u32 %v1019, 4294901760
        %v1117 = vsub.f32 %v1019, %v1116
        %v1118 = vand.u32 %v1117, 4294901760
        %v1119 = vsub.f32 %v1117, %v1118
        %v1120 = vand.u32 %v1119, 4294901760
        %1121 = vmatmul.mubr.f32.gmra.mxu0 %v1120
        %v1122 = vpop.f32.mrf.mxu0
        %v1123 = vadd.f32 %v997, %v1122
        %v1124 = vpop.f32.mrf.mxu0
        %v1125 = vadd.f32 %v997, %v1124
        %1126 = vmatprep.mubr.f32.mxu0 0.0
        %v1127 = vand.u32 %v1022, 4294901760
        %v1128 = vsub.f32 %v1022, %v1127
        %v1129 = vand.u32 %v1128, 4294901760
        %v1130 = vsub.f32 %v1128, %v1129
        %v1131 = vand.u32 %v1130, 4294901760
        %1132 = vmatmul.mubr.f32.gmra.mxu0 %v1131
        %v1133 = vpop.f32.mrf.mxu0
        %v1134 = vadd.f32 %v1002, %v1133
        %v1135 = vpop.f32.mrf.mxu0
        %v1136 = vadd.f32 %v1002, %v1135
        %1137 = vmatprep.mubr.f32.mxu0 0.0
        %v1138 = vand.u32 %v1025, 4294901760
        %v1139 = vsub.f32 %v1025, %v1138
        %v1140 = vand.u32 %v1139, 4294901760
        %v1141 = vsub.f32 %v1139, %v1140
        %v1142 = vand.u32 %v1141, 4294901760
        %1143 = vmatmul.mubr.f32.gmra.mxu0 %v1142
        %v1144 = vpop.f32.mrf.mxu0
        %v1145 = vadd.f32 %v1007, %v1144
        %v1146 = vpop.f32.mrf.mxu0
        %v1147 = vadd.f32 %v1007, %v1146
        %1148 = vmatprep.mubr.f32.mxu0 0.0
        %v1149 = vand.u32 %v1028, 4294901760
        %v1150 = vsub.f32 %v1028, %v1149
        %v1151 = vand.u32 %v1150, 4294901760
        %v1152 = vsub.f32 %v1150, %v1151
        %v1153 = vand.u32 %v1152, 4294901760
        %1154 = vmatmul.mubr.f32.gmra.mxu0 %v1153
        %v1155 = vpop.f32.mrf.mxu0
        %v1156 = vadd.f32 %v1012, %v1155
        %v1157 = vpop.f32.mrf.mxu0
        %v1158 = vadd.f32 %v1012, %v1157
        %1159 = vdwg.mxu0
        %1160 = vmatprep.subr.mxu0 0.0
        %1161 = vmatpush1.msra.mxu0 0.0
        %1162 = vmatprep.subr.mxu0 0.0
        %1163 = vmatpush1.msra.mxu0 0.0
        %1164 = vmatprep.subr.mxu0 0.0
        %1165 = vmatpush1.msra.mxu0 0.0
        %1166 = vmatprep.subr.mxu0 0.0
        %1167 = vmatpush1.msra.mxu0 0.0
        %1168 = vmatprep.subr.mxu0 0.0
        %1169 = vmatpush1.msra.mxu0 0.0
        %1170 = vmatprep.subr.mxu0 0.0
        %1171 = vmatpush1.msra.mxu0 0.0
        %1172 = vmatprep.subr.mxu0 0.0
        %1173 = vmatpush1.msra.mxu0 0.0
        %1174 = vmatprep.subr.mxu0 0.0
        %1175 = vmatpush1.msra.mxu0 0.0
        %1176 = vmatprep.subr.mxu0 0.0
        %1177 = vmatpush1.msra.mxu0 0.0
        %1178 = vmatprep.subr.mxu0 0.0
        %1179 = vmatpush1.msra.mxu0 0.0
        %1180 = vmatprep.subr.mxu0 0.0
        %1181 = vmatpush1.msra.mxu0 0.0
        %v1182 = vand.u32 %v988, 4294901760
        %v1183 = vsub.f32 %v988, %v1182
        %v1184 = vand.u32 %v1183, 4294901760
        %v1185 = vsub.f32 %v1183, %v1184
        %v1186 = vand.u32 %v1185, 4294901760
        %1187 = vmatprep.subr.mxu0 %v1186
        %v1188 = vand.u32 %v987, 4294901760
        %v1189 = vsub.f32 %v987, %v1188
        %v1190 = vand.u32 %v1189, 4294901760
        %v1191 = vsub.f32 %v1189, %v1190
        %v1192 = vand.u32 %v1191, 4294901760
        %1193 = vmatpush1.msra.mxu0 %v1192
        %v1194 = vand.u32 %v986, 4294901760
        %v1195 = vsub.f32 %v986, %v1194
        %v1196 = vand.u32 %v1195, 4294901760
        %v1197 = vsub.f32 %v1195, %v1196
        %v1198 = vand.u32 %v1197, 4294901760
        %1199 = vmatprep.subr.mxu0 %v1198
        %v1200 = vand.u32 %v985, 4294901760
        %v1201 = vsub.f32 %v985, %v1200
        %v1202 = vand.u32 %v1201, 4294901760
        %v1203 = vsub.f32 %v1201, %v1202
        %v1204 = vand.u32 %v1203, 4294901760
        %1205 = vmatpush1.msra.mxu0 %v1204
        %v1206 = vand.u32 %v984, 4294901760
        %v1207 = vsub.f32 %v984, %v1206
        %v1208 = vand.u32 %v1207, 4294901760
        %v1209 = vsub.f32 %v1207, %v1208
        %v1210 = vand.u32 %v1209, 4294901760
        %1211 = vmatprep.subr.mxu0 %v1210
        %v1212 = vand.u32 %v983, 4294901760
        %v1213 = vsub.f32 %v983, %v1212
        %v1214 = vand.u32 %v1213, 4294901760
        %v1215 = vsub.f32 %v1213, %v1214
        %v1216 = vand.u32 %v1215, 4294901760
        %1217 = vmatpush1.msra.mxu0 %v1216
        %v1218 = vand.u32 %v982, 4294901760
        %v1219 = vsub.f32 %v982, %v1218
        %v1220 = vand.u32 %v1219, 4294901760
        %v1221 = vsub.f32 %v1219, %v1220
        %v1222 = vand.u32 %v1221, 4294901760
        %1223 = vmatprep.subr.mxu0 %v1222
        %v1224 = vand.u32 %v981, 4294901760
        %v1225 = vsub.f32 %v981, %v1224
        %v1226 = vand.u32 %v1225, 4294901760
        %v1227 = vsub.f32 %v1225, %v1226
        %v1228 = vand.u32 %v1227, 4294901760
        %1229 = vmatpush1.msra.mxu0 %v1228
        %v1230 = vand.u32 %v980, 4294901760
        %v1231 = vsub.f32 %v980, %v1230
        %v1232 = vand.u32 %v1231, 4294901760
        %v1233 = vsub.f32 %v1231, %v1232
        %v1234 = vand.u32 %v1233, 4294901760
        %1235 = vmatprep.subr.mxu0 %v1234
        %v1236 = vand.u32 %v979, 4294901760
        %v1237 = vsub.f32 %v979, %v1236
        %v1238 = vand.u32 %v1237, 4294901760
        %v1239 = vsub.f32 %v1237, %v1238
        %v1240 = vand.u32 %v1239, 4294901760
        %1241 = vmatpush1.msra.mxu0 %v1240
        %1242 = vmatprep.subr.mxu0 0.0
        %1243 = vmatpush2.msra.mxu0 0.0
        %1244 = vmatprep.subr.mxu0 0.0
        %1245 = vmatpush2.msra.mxu0 0.0
        %1246 = vmatprep.subr.mxu0 0.0
        %1247 = vmatpush2.msra.mxu0 0.0
        %1248 = vmatprep.subr.mxu0 0.0
        %1249 = vmatpush2.msra.mxu0 0.0
        %1250 = vmatprep.subr.mxu0 0.0
        %1251 = vmatpush2.msra.mxu0 0.0
        %1252 = vmatprep.subr.mxu0 0.0
        %1253 = vmatpush2.msra.mxu0 0.0
        %1254 = vmatprep.subr.mxu0 0.0
        %1255 = vmatpush2.msra.mxu0 0.0
        %1256 = vmatprep.subr.mxu0 0.0
        %1257 = vmatpush2.msra.mxu0 0.0
        %1258 = vmatprep.subr.mxu0 0.0
        %1259 = vmatpush2.msra.mxu0 0.0
        %1260 = vmatprep.subr.mxu0 0.0
        %1261 = vmatpush2.msra.mxu0 0.0
        %1262 = vmatprep.subr.mxu0 0.0
        %1263 = vmatpush2.msra.mxu0 0.0
        %1264 = vmatprep.subr.mxu0 0.0
        %1265 = vmatpush2.msra.mxu0 0.0
        %1266 = vmatprep.subr.mxu0 0.0
        %1267 = vmatpush2.msra.mxu0 0.0
        %1268 = vmatprep.subr.mxu0 0.0
        %1269 = vmatpush2.msra.mxu0 0.0
        %1270 = vmatprep.subr.mxu0 0.0
        %1271 = vmatpush2.msra.mxu0 0.0
        %1272 = vmatprep.subr.mxu0 0.0
        %1273 = vmatpush2.msra.mxu0 0.0
        %1274 = vmatprep.mubr.f32.mxu0 0.0
        %v1275 = vand.u32 %v1016, 4294901760
        %1276 = vmatmul.mubr.f32.gmra.mxu0 %v1275
        %v1277 = vpop.f32.mrf.mxu0
        %v1278 = vadd.f32 %v1112, %v1277
        %v1279 = vpop.f32.mrf.mxu0
        %v1280 = vadd.f32 %v1114, %v1279
        %1281 = vmatprep.mubr.f32.mxu0 0.0
        %v1282 = vand.u32 %v1019, 4294901760
        %1283 = vmatmul.mubr.f32.gmra.mxu0 %v1282
        %v1284 = vpop.f32.mrf.mxu0
        %v1285 = vadd.f32 %v1123, %v1284
        %v1286 = vpop.f32.mrf.mxu0
        %v1287 = vadd.f32 %v1125, %v1286
        %1288 = vmatprep.mubr.f32.mxu0 0.0
        %v1289 = vand.u32 %v1022, 4294901760
        %1290 = vmatmul.mubr.f32.gmra.mxu0 %v1289
        %v1291 = vpop.f32.mrf.mxu0
        %v1292 = vadd.f32 %v1134, %v1291
        %v1293 = vpop.f32.mrf.mxu0
        %v1294 = vadd.f32 %v1136, %v1293
        %1295 = vmatprep.mubr.f32.mxu0 0.0
        %v1296 = vand.u32 %v1025, 4294901760
        %1297 = vmatmul.mubr.f32.gmra.mxu0 %v1296
        %v1298 = vpop.f32.mrf.mxu0
        %v1299 = vadd.f32 %v1145, %v1298
        %v1300 = vpop.f32.mrf.mxu0
        %v1301 = vadd.f32 %v1147, %v1300
        %1302 = vmatprep.mubr.f32.mxu0 0.0
        %v1303 = vand.u32 %v1028, 4294901760
        %1304 = vmatmul.mubr.f32.gmra.mxu0 %v1303
        %v1305 = vpop.f32.mrf.mxu0
        %v1306 = vadd.f32 %v1156, %v1305
        %v1307 = vpop.f32.mrf.mxu0
        %v1308 = vadd.f32 %v1158, %v1307
        %1309 = vdwg.mxu0
        %1310 = vmatprep.subr.mxu0 0.0
        %1311 = vmatpush1.msra.mxu0 0.0
        %1312 = vmatprep.subr.mxu0 0.0
        %1313 = vmatpush1.msra.mxu0 0.0
        %1314 = vmatprep.subr.mxu0 0.0
        %1315 = vmatpush1.msra.mxu0 0.0
        %1316 = vmatprep.subr.mxu0 0.0
        %1317 = vmatpush1.msra.mxu0 0.0
        %1318 = vmatprep.subr.mxu0 0.0
        %1319 = vmatpush1.msra.mxu0 0.0
        %1320 = vmatprep.subr.mxu0 0.0
        %1321 = vmatpush1.msra.mxu0 0.0
        %1322 = vmatprep.subr.mxu0 0.0
        %1323 = vmatpush1.msra.mxu0 0.0
        %1324 = vmatprep.subr.mxu0 0.0
        %1325 = vmatpush1.msra.mxu0 0.0
        %1326 = vmatprep.subr.mxu0 0.0
        %1327 = vmatpush1.msra.mxu0 0.0
        %1328 = vmatprep.subr.mxu0 0.0
        %1329 = vmatpush1.msra.mxu0 0.0
        %1330 = vmatprep.subr.mxu0 0.0
        %1331 = vmatpush1.msra.mxu0 0.0
        %v1332 = vand.u32 %v988, 4294901760
        %v1333 = vsub.f32 %v988, %v1332
        %1334 = vmatprep.subr.mxu0 %v1333
        %v1335 = vand.u32 %v987, 4294901760
        %v1336 = vsub.f32 %v987, %v1335
        %1337 = vmatpush1.msra.mxu0 %v1336
        %v1338 = vand.u32 %v986, 4294901760
        %v1339 = vsub.f32 %v986, %v1338
        %1340 = vmatprep.subr.mxu0 %v1339
        %v1341 = vand.u32 %v985, 4294901760
        %v1342 = vsub.f32 %v985, %v1341
        %1343 = vmatpush1.msra.mxu0 %v1342
        %v1344 = vand.u32 %v984, 4294901760
        %v1345 = vsub.f32 %v984, %v1344
        %1346 = vmatprep.subr.mxu0 %v1345
        %v1347 = vand.u32 %v983, 4294901760
        %v1348 = vsub.f32 %v983, %v1347
        %1349 = vmatpush1.msra.mxu0 %v1348
        %v1350 = vand.u32 %v982, 4294901760
        %v1351 = vsub.f32 %v982, %v1350
        %1352 = vmatprep.subr.mxu0 %v1351
        %v1353 = vand.u32 %v981, 4294901760
        %v1354 = vsub.f32 %v981, %v1353
        %1355 = vmatpush1.msra.mxu0 %v1354
        %v1356 = vand.u32 %v980, 4294901760
        %v1357 = vsub.f32 %v980, %v1356
        %1358 = vmatprep.subr.mxu0 %v1357
        %v1359 = vand.u32 %v979, 4294901760
        %v1360 = vsub.f32 %v979, %v1359
        %1361 = vmatpush1.msra.mxu0 %v1360
        %1362 = vmatprep.subr.mxu0 0.0
        %1363 = vmatpush2.msra.mxu0 0.0
        %1364 = vmatprep.subr.mxu0 0.0
        %1365 = vmatpush2.msra.mxu0 0.0
        %1366 = vmatprep.subr.mxu0 0.0
        %1367 = vmatpush2.msra.mxu0 0.0
        %1368 = vmatprep.subr.mxu0 0.0
        %1369 = vmatpush2.msra.mxu0 0.0
        %1370 = vmatprep.subr.mxu0 0.0
        %1371 = vmatpush2.msra.mxu0 0.0
        %1372 = vmatprep.subr.mxu0 0.0
        %1373 = vmatpush2.msra.mxu0 0.0
        %1374 = vmatprep.subr.mxu0 0.0
        %1375 = vmatpush2.msra.mxu0 0.0
        %1376 = vmatprep.subr.mxu0 0.0
        %1377 = vmatpush2.msra.mxu0 0.0
        %1378 = vmatprep.subr.mxu0 0.0
        %1379 = vmatpush2.msra.mxu0 0.0
        %1380 = vmatprep.subr.mxu0 0.0
        %1381 = vmatpush2.msra.mxu0 0.0
        %1382 = vmatprep.subr.mxu0 0.0
        %1383 = vmatpush2.msra.mxu0 0.0
        %1384 = vmatprep.subr.mxu0 0.0
        %1385 = vmatpush2.msra.mxu0 0.0
        %1386 = vmatprep.subr.mxu0 0.0
        %1387 = vmatpush2.msra.mxu0 0.0
        %1388 = vmatprep.subr.mxu0 0.0
        %1389 = vmatpush2.msra.mxu0 0.0
        %1390 = vmatprep.subr.mxu0 0.0
        %1391 = vmatpush2.msra.mxu0 0.0
        %1392 = vmatprep.subr.mxu0 0.0
        %1393 = vmatpush2.msra.mxu0 0.0
        %1394 = vmatprep.mubr.f32.mxu0 0.0
        %v1395 = vand.u32 %v1016, 4294901760
        %v1396 = vsub.f32 %v1016, %v1395
        %1397 = vmatmul.mubr.f32.gmra.mxu0 %v1396
        %v1398 = vpop.f32.mrf.mxu0
        %v1399 = vadd.f32 %v1278, %v1398
        %v1400 = vpop.f32.mrf.mxu0
        %v1401 = vadd.f32 %v1280, %v1400
        %1402 = vmatprep.mubr.f32.mxu0 0.0
        %v1403 = vand.u32 %v1019, 4294901760
        %v1404 = vsub.f32 %v1019, %v1403
        %1405 = vmatmul.mubr.f32.gmra.mxu0 %v1404
        %v1406 = vpop.f32.mrf.mxu0
        %v1407 = vadd.f32 %v1285, %v1406
        %v1408 = vpop.f32.mrf.mxu0
        %v1409 = vadd.f32 %v1287, %v1408
        %1410 = vmatprep.mubr.f32.mxu0 0.0
        %v1411 = vand.u32 %v1022, 4294901760
        %v1412 = vsub.f32 %v1022, %v1411
        %1413 = vmatmul.mubr.f32.gmra.mxu0 %v1412
        %v1414 = vpop.f32.mrf.mxu0
        %v1415 = vadd.f32 %v1292, %v1414
        %v1416 = vpop.f32.mrf.mxu0
        %v1417 = vadd.f32 %v1294, %v1416
        %1418 = vmatprep.mubr.f32.mxu0 0.0
        %v1419 = vand.u32 %v1025, 4294901760
        %v1420 = vsub.f32 %v1025, %v1419
        %1421 = vmatmul.mubr.f32.gmra.mxu0 %v1420
        %v1422 = vpop.f32.mrf.mxu0
        %v1423 = vadd.f32 %v1299, %v1422
        %v1424 = vpop.f32.mrf.mxu0
        %v1425 = vadd.f32 %v1301, %v1424
        %1426 = vmatprep.mubr.f32.mxu0 0.0
        %v1427 = vand.u32 %v1028, 4294901760
        %v1428 = vsub.f32 %v1028, %v1427
        %1429 = vmatmul.mubr.f32.gmra.mxu0 %v1428
        %v1430 = vpop.f32.mrf.mxu0
        %v1431 = vadd.f32 %v1306, %v1430
        %v1432 = vpop.f32.mrf.mxu0
        %v1433 = vadd.f32 %v1308, %v1432
        %1434 = vdwg.mxu0
        %1435 = vmatprep.subr.mxu0 0.0
        %1436 = vmatpush1.msra.mxu0 0.0
        %1437 = vmatprep.subr.mxu0 0.0
        %1438 = vmatpush1.msra.mxu0 0.0
        %1439 = vmatprep.subr.mxu0 0.0
        %1440 = vmatpush1.msra.mxu0 0.0
        %1441 = vmatprep.subr.mxu0 0.0
        %1442 = vmatpush1.msra.mxu0 0.0
        %1443 = vmatprep.subr.mxu0 0.0
        %1444 = vmatpush1.msra.mxu0 0.0
        %1445 = vmatprep.subr.mxu0 0.0
        %1446 = vmatpush1.msra.mxu0 0.0
        %1447 = vmatprep.subr.mxu0 0.0
        %1448 = vmatpush1.msra.mxu0 0.0
        %1449 = vmatprep.subr.mxu0 0.0
        %1450 = vmatpush1.msra.mxu0 0.0
        %1451 = vmatprep.subr.mxu0 0.0
        %1452 = vmatpush1.msra.mxu0 0.0
        %1453 = vmatprep.subr.mxu0 0.0
        %1454 = vmatpush1.msra.mxu0 0.0
        %1455 = vmatprep.subr.mxu0 0.0
        %1456 = vmatpush1.msra.mxu0 0.0
        %v1457 = vand.u32 %v988, 4294901760
        %1458 = vmatprep.subr.mxu0 %v1457
        %v1459 = vand.u32 %v987, 4294901760
        %1460 = vmatpush1.msra.mxu0 %v1459
        %v1461 = vand.u32 %v986, 4294901760
        %1462 = vmatprep.subr.mxu0 %v1461
        %v1463 = vand.u32 %v985, 4294901760
        %1464 = vmatpush1.msra.mxu0 %v1463
        %v1465 = vand.u32 %v984, 4294901760
        %1466 = vmatprep.subr.mxu0 %v1465
        %v1467 = vand.u32 %v983, 4294901760
        %1468 = vmatpush1.msra.mxu0 %v1467
        %v1469 = vand.u32 %v982, 4294901760
        %1470 = vmatprep.subr.mxu0 %v1469
        %v1471 = vand.u32 %v981, 4294901760
        %1472 = vmatpush1.msra.mxu0 %v1471
        %v1473 = vand.u32 %v980, 4294901760
        %1474 = vmatprep.subr.mxu0 %v1473
        %v1475 = vand.u32 %v979, 4294901760
        %1476 = vmatpush1.msra.mxu0 %v1475
        %1477 = vmatprep.subr.mxu0 0.0
        %1478 = vmatpush2.msra.mxu0 0.0
        %1479 = vmatprep.subr.mxu0 0.0
        %1480 = vmatpush2.msra.mxu0 0.0
        %1481 = vmatprep.subr.mxu0 0.0
        %1482 = vmatpush2.msra.mxu0 0.0
        %1483 = vmatprep.subr.mxu0 0.0
        %1484 = vmatpush2.msra.mxu0 0.0
        %1485 = vmatprep.subr.mxu0 0.0
        %1486 = vmatpush2.msra.mxu0 0.0
        %1487 = vmatprep.subr.mxu0 0.0
        %1488 = vmatpush2.msra.mxu0 0.0
        %1489 = vmatprep.subr.mxu0 0.0
        %1490 = vmatpush2.msra.mxu0 0.0
        %1491 = vmatprep.subr.mxu0 0.0
        %1492 = vmatpush2.msra.mxu0 0.0
        %1493 = vmatprep.subr.mxu0 0.0
        %1494 = vmatpush2.msra.mxu0 0.0
        %1495 = vmatprep.subr.mxu0 0.0
        %1496 = vmatpush2.msra.mxu0 0.0
        %1497 = vmatprep.subr.mxu0 0.0
        %1498 = vmatpush2.msra.mxu0 0.0
        %1499 = vmatprep.subr.mxu0 0.0
        %1500 = vmatpush2.msra.mxu0 0.0
        %1501 = vmatprep.subr.mxu0 0.0
        %1502 = vmatpush2.msra.mxu0 0.0
        %1503 = vmatprep.subr.mxu0 0.0
        %1504 = vmatpush2.msra.mxu0 0.0
        %1505 = vmatprep.subr.mxu0 0.0
        %1506 = vmatpush2.msra.mxu0 0.0
        %1507 = vmatprep.subr.mxu0 0.0
        %1508 = vmatpush2.msra.mxu0 0.0
        %1509 = vmatprep.mubr.f32.mxu0 0.0
        %v1510 = vand.u32 %v1016, 4294901760
        %v1511 = vsub.f32 %v1016, %v1510
        %v1512 = vand.u32 %v1511, 4294901760
        %1513 = vmatmul.mubr.f32.gmra.mxu0 %v1512
        %v1514 = vpop.f32.mrf.mxu0
        %v1515 = vadd.f32 %v1399, %v1514
        %v1516 = vpop.f32.mrf.mxu0
        %v1517 = vadd.f32 %v1401, %v1516
        %1518 = vmatprep.mubr.f32.mxu0 0.0
        %v1519 = vand.u32 %v1019, 4294901760
        %v1520 = vsub.f32 %v1019, %v1519
        %v1521 = vand.u32 %v1520, 4294901760
        %1522 = vmatmul.mubr.f32.gmra.mxu0 %v1521
        %v1523 = vpop.f32.mrf.mxu0
        %v1524 = vadd.f32 %v1407, %v1523
        %v1525 = vpop.f32.mrf.mxu0
        %v1526 = vadd.f32 %v1409, %v1525
        %1527 = vmatprep.mubr.f32.mxu0 0.0
        %v1528 = vand.u32 %v1022, 4294901760
        %v1529 = vsub.f32 %v1022, %v1528
        %v1530 = vand.u32 %v1529, 4294901760
        %1531 = vmatmul.mubr.f32.gmra.mxu0 %v1530
        %v1532 = vpop.f32.mrf.mxu0
        %v1533 = vadd.f32 %v1415, %v1532
        %v1534 = vpop.f32.mrf.mxu0
        %v1535 = vadd.f32 %v1417, %v1534
        %1536 = vmatprep.mubr.f32.mxu0 0.0
        %v1537 = vand.u32 %v1025, 4294901760
        %v1538 = vsub.f32 %v1025, %v1537
        %v1539 = vand.u32 %v1538, 4294901760
        %1540 = vmatmul.mubr.f32.gmra.mxu0 %v1539
        %v1541 = vpop.f32.mrf.mxu0
        %v1542 = vadd.f32 %v1423, %v1541
        %v1543 = vpop.f32.mrf.mxu0
        %v1544 = vadd.f32 %v1425, %v1543
        %1545 = vmatprep.mubr.f32.mxu0 0.0
        %v1546 = vand.u32 %v1028, 4294901760
        %v1547 = vsub.f32 %v1028, %v1546
        %v1548 = vand.u32 %v1547, 4294901760
        %1549 = vmatmul.mubr.f32.gmra.mxu0 %v1548
        %v1550 = vpop.f32.mrf.mxu0
        %v1551 = vadd.f32 %v1431, %v1550
        %v1552 = vpop.f32.mrf.mxu0
        %v1553 = vadd.f32 %v1433, %v1552
        %1554 = vdwg.mxu0
        %1555 = vmatprep.subr.mxu0 0.0
        %1556 = vmatpush1.msra.mxu0 0.0
        %1557 = vmatprep.subr.mxu0 0.0
        %1558 = vmatpush1.msra.mxu0 0.0
        %1559 = vmatprep.subr.mxu0 0.0
        %1560 = vmatpush1.msra.mxu0 0.0
        %1561 = vmatprep.subr.mxu0 0.0
        %1562 = vmatpush1.msra.mxu0 0.0
        %1563 = vmatprep.subr.mxu0 0.0
        %1564 = vmatpush1.msra.mxu0 0.0
        %1565 = vmatprep.subr.mxu0 0.0
        %1566 = vmatpush1.msra.mxu0 0.0
        %1567 = vmatprep.subr.mxu0 0.0
        %1568 = vmatpush1.msra.mxu0 0.0
        %1569 = vmatprep.subr.mxu0 0.0
        %1570 = vmatpush1.msra.mxu0 0.0
        %1571 = vmatprep.subr.mxu0 0.0
        %1572 = vmatpush1.msra.mxu0 0.0
        %1573 = vmatprep.subr.mxu0 0.0
        %1574 = vmatpush1.msra.mxu0 0.0
        %1575 = vmatprep.subr.mxu0 0.0
        %1576 = vmatpush1.msra.mxu0 0.0
        %v1577 = vand.u32 %v988, 4294901760
        %v1578 = vsub.f32 %v988, %v1577
        %v1579 = vand.u32 %v1578, 4294901760
        %1580 = vmatprep.subr.mxu0 %v1579
        %v1581 = vand.u32 %v987, 4294901760
        %v1582 = vsub.f32 %v987, %v1581
        %v1583 = vand.u32 %v1582, 4294901760
        %1584 = vmatpush1.msra.mxu0 %v1583
        %v1585 = vand.u32 %v986, 4294901760
        %v1586 = vsub.f32 %v986, %v1585
        %v1587 = vand.u32 %v1586, 4294901760
        %1588 = vmatprep.subr.mxu0 %v1587
        %v1589 = vand.u32 %v985, 4294901760
        %v1590 = vsub.f32 %v985, %v1589
        %v1591 = vand.u32 %v1590, 4294901760
        %1592 = vmatpush1.msra.mxu0 %v1591
        %v1593 = vand.u32 %v984, 4294901760
        %v1594 = vsub.f32 %v984, %v1593
        %v1595 = vand.u32 %v1594, 4294901760
        %1596 = vmatprep.subr.mxu0 %v1595
        %v1597 = vand.u32 %v983, 4294901760
        %v1598 = vsub.f32 %v983, %v1597
        %v1599 = vand.u32 %v1598, 4294901760
        %1600 = vmatpush1.msra.mxu0 %v1599
        %v1601 = vand.u32 %v982, 4294901760
        %v1602 = vsub.f32 %v982, %v1601
        %v1603 = vand.u32 %v1602, 4294901760
        %1604 = vmatprep.subr.mxu0 %v1603
        %v1605 = vand.u32 %v981, 4294901760
        %v1606 = vsub.f32 %v981, %v1605
        %v1607 = vand.u32 %v1606, 4294901760
        %1608 = vmatpush1.msra.mxu0 %v1607
        %v1609 = vand.u32 %v980, 4294901760
        %v1610 = vsub.f32 %v980, %v1609
        %v1611 = vand.u32 %v1610, 4294901760
        %1612 = vmatprep.subr.mxu0 %v1611
        %v1613 = vand.u32 %v979, 4294901760
        %v1614 = vsub.f32 %v979, %v1613
        %v1615 = vand.u32 %v1614, 4294901760
        %1616 = vmatpush1.msra.mxu0 %v1615
        %1617 = vmatprep.subr.mxu0 0.0
        %1618 = vmatpush2.msra.mxu0 0.0
        %1619 = vmatprep.subr.mxu0 0.0
        %1620 = vmatpush2.msra.mxu0 0.0
        %1621 = vmatprep.subr.mxu0 0.0
        %1622 = vmatpush2.msra.mxu0 0.0
        %1623 = vmatprep.subr.mxu0 0.0
        %1624 = vmatpush2.msra.mxu0 0.0
        %1625 = vmatprep.subr.mxu0 0.0
        %1626 = vmatpush2.msra.mxu0 0.0
        %1627 = vmatprep.subr.mxu0 0.0
        %1628 = vmatpush2.msra.mxu0 0.0
        %1629 = vmatprep.subr.mxu0 0.0
        %1630 = vmatpush2.msra.mxu0 0.0
        %1631 = vmatprep.subr.mxu0 0.0
        %1632 = vmatpush2.msra.mxu0 0.0
        %1633 = vmatprep.subr.mxu0 0.0
        %1634 = vmatpush2.msra.mxu0 0.0
        %1635 = vmatprep.subr.mxu0 0.0
        %1636 = vmatpush2.msra.mxu0 0.0
        %1637 = vmatprep.subr.mxu0 0.0
        %1638 = vmatpush2.msra.mxu0 0.0
        %1639 = vmatprep.subr.mxu0 0.0
        %1640 = vmatpush2.msra.mxu0 0.0
        %1641 = vmatprep.subr.mxu0 0.0
        %1642 = vmatpush2.msra.mxu0 0.0
        %1643 = vmatprep.subr.mxu0 0.0
        %1644 = vmatpush2.msra.mxu0 0.0
        %1645 = vmatprep.subr.mxu0 0.0
        %1646 = vmatpush2.msra.mxu0 0.0
        %1647 = vmatprep.subr.mxu0 0.0
        %1648 = vmatpush2.msra.mxu0 0.0
        %1649 = vmatprep.mubr.f32.mxu0 0.0
        %v1650 = vand.u32 %v1016, 4294901760
        %1651 = vmatmul.mubr.f32.gmra.mxu0 %v1650
        %v1652 = vpop.f32.mrf.mxu0
        %v1653 = vadd.f32 %v1515, %v1652
        %v1654 = vpop.f32.mrf.mxu0
        %v1655 = vadd.f32 %v1517, %v1654
        %1656 = vmatprep.mubr.f32.mxu0 0.0
        %v1657 = vand.u32 %v1019, 4294901760
        %1658 = vmatmul.mubr.f32.gmra.mxu0 %v1657
        %v1659 = vpop.f32.mrf.mxu0
        %v1660 = vadd.f32 %v1524, %v1659
        %v1661 = vpop.f32.mrf.mxu0
        %v1662 = vadd.f32 %v1526, %v1661
        %1663 = vmatprep.mubr.f32.mxu0 0.0
        %v1664 = vand.u32 %v1022, 4294901760
        %1665 = vmatmul.mubr.f32.gmra.mxu0 %v1664
        %v1666 = vpop.f32.mrf.mxu0
        %v1667 = vadd.f32 %v1533, %v1666
        %v1668 = vpop.f32.mrf.mxu0
        %v1669 = vadd.f32 %v1535, %v1668
        %1670 = vmatprep.mubr.f32.mxu0 0.0
        %v1671 = vand.u32 %v1025, 4294901760
        %1672 = vmatmul.mubr.f32.gmra.mxu0 %v1671
        %v1673 = vpop.f32.mrf.mxu0
        %v1674 = vadd.f32 %v1542, %v1673
        %v1675 = vpop.f32.mrf.mxu0
        %v1676 = vadd.f32 %v1544, %v1675
        %1677 = vmatprep.mubr.f32.mxu0 0.0
        %v1678 = vand.u32 %v1028, 4294901760
        %1679 = vmatmul.mubr.f32.gmra.mxu0 %v1678
        %v1680 = vpop.f32.mrf.mxu0
        %v1681 = vadd.f32 %v1551, %v1680
        %v1682 = vpop.f32.mrf.mxu0
        %v1683 = vadd.f32 %v1553, %v1682
        %1684 = vdwg.mxu0
        %1685 = vmatprep.subr.mxu0 0.0
        %1686 = vmatpush1.msra.mxu0 0.0
        %1687 = vmatprep.subr.mxu0 0.0
        %1688 = vmatpush1.msra.mxu0 0.0
        %1689 = vmatprep.subr.mxu0 0.0
        %1690 = vmatpush1.msra.mxu0 0.0
        %1691 = vmatprep.subr.mxu0 0.0
        %1692 = vmatpush1.msra.mxu0 0.0
        %1693 = vmatprep.subr.mxu0 0.0
        %1694 = vmatpush1.msra.mxu0 0.0
        %1695 = vmatprep.subr.mxu0 0.0
        %1696 = vmatpush1.msra.mxu0 0.0
        %1697 = vmatprep.subr.mxu0 0.0
        %1698 = vmatpush1.msra.mxu0 0.0
        %1699 = vmatprep.subr.mxu0 0.0
        %1700 = vmatpush1.msra.mxu0 0.0
        %1701 = vmatprep.subr.mxu0 0.0
        %1702 = vmatpush1.msra.mxu0 0.0
        %1703 = vmatprep.subr.mxu0 0.0
        %1704 = vmatpush1.msra.mxu0 0.0
        %1705 = vmatprep.subr.mxu0 0.0
        %1706 = vmatpush1.msra.mxu0 0.0
        %v1707 = vand.u32 %v988, 4294901760
        %1708 = vmatprep.subr.mxu0 %v1707
        %v1709 = vand.u32 %v987, 4294901760
        %1710 = vmatpush1.msra.mxu0 %v1709
        %v1711 = vand.u32 %v986, 4294901760
        %1712 = vmatprep.subr.mxu0 %v1711
        %v1713 = vand.u32 %v985, 4294901760
        %1714 = vmatpush1.msra.mxu0 %v1713
        %v1715 = vand.u32 %v984, 4294901760
        %1716 = vmatprep.subr.mxu0 %v1715
        %v1717 = vand.u32 %v983, 4294901760
        %1718 = vmatpush1.msra.mxu0 %v1717
        %v1719 = vand.u32 %v982, 4294901760
        %1720 = vmatprep.subr.mxu0 %v1719
        %v1721 = vand.u32 %v981, 4294901760
        %1722 = vmatpush1.msra.mxu0 %v1721
        %v1723 = vand.u32 %v980, 4294901760
        %1724 = vmatprep.subr.mxu0 %v1723
        %v1725 = vand.u32 %v979, 4294901760
        %1726 = vmatpush1.msra.mxu0 %v1725
        %1727 = vmatprep.subr.mxu0 0.0
        %1728 = vmatpush2.msra.mxu0 0.0
        %1729 = vmatprep.subr.mxu0 0.0
        %1730 = vmatpush2.msra.mxu0 0.0
        %1731 = vmatprep.subr.mxu0 0.0
        %1732 = vmatpush2.msra.mxu0 0.0
        %1733 = vmatprep.subr.mxu0 0.0
        %1734 = vmatpush2.msra.mxu0 0.0
        %1735 = vmatprep.subr.mxu0 0.0
        %1736 = vmatpush2.msra.mxu0 0.0
        %1737 = vmatprep.subr.mxu0 0.0
        %1738 = vmatpush2.msra.mxu0 0.0
        %1739 = vmatprep.subr.mxu0 0.0
        %1740 = vmatpush2.msra.mxu0 0.0
        %1741 = vmatprep.subr.mxu0 0.0
        %1742 = vmatpush2.msra.mxu0 0.0
        %1743 = vmatprep.subr.mxu0 0.0
        %1744 = vmatpush2.msra.mxu0 0.0
        %1745 = vmatprep.subr.mxu0 0.0
        %1746 = vmatpush2.msra.mxu0 0.0
        %1747 = vmatprep.subr.mxu0 0.0
        %1748 = vmatpush2.msra.mxu0 0.0
        %1749 = vmatprep.subr.mxu0 0.0
        %1750 = vmatpush2.msra.mxu0 0.0
        %1751 = vmatprep.subr.mxu0 0.0
        %1752 = vmatpush2.msra.mxu0 0.0
        %1753 = vmatprep.subr.mxu0 0.0
        %1754 = vmatpush2.msra.mxu0 0.0
        %1755 = vmatprep.subr.mxu0 0.0
        %1756 = vmatpush2.msra.mxu0 0.0
        %1757 = vmatprep.subr.mxu0 0.0
        %1758 = vmatpush2.msra.mxu0 0.0
        %1759 = vmatprep.mubr.f32.mxu0 0.0
        %v1760 = vand.u32 %v1016, 4294901760
        %1761 = vmatmul.mubr.f32.gmra.mxu0 %v1760
        %v1762 = vpop.f32.mrf.mxu0
        %v1763 = vadd.f32 %v1653, %v1762
        %v1764 = vpop.f32.mrf.mxu0
        %v1765 = vadd.f32 %v1655, %v1764
        %1766 = vmatprep.mubr.f32.mxu0 0.0
        %v1767 = vand.u32 %v1019, 4294901760
        %1768 = vmatmul.mubr.f32.gmra.mxu0 %v1767
        %v1769 = vpop.f32.mrf.mxu0
        %v1770 = vadd.f32 %v1660, %v1769
        %v1771 = vpop.f32.mrf.mxu0
        %v1772 = vadd.f32 %v1662, %v1771
        %1773 = vmatprep.mubr.f32.mxu0 0.0
        %v1774 = vand.u32 %v1022, 4294901760
        %1775 = vmatmul.mubr.f32.gmra.mxu0 %v1774
        %v1776 = vpop.f32.mrf.mxu0
        %v1777 = vadd.f32 %v1667, %v1776
        %v1778 = vpop.f32.mrf.mxu0
        %v1779 = vadd.f32 %v1669, %v1778
        %1780 = vmatprep.mubr.f32.mxu0 0.0
        %v1781 = vand.u32 %v1025, 4294901760
        %1782 = vmatmul.mubr.f32.gmra.mxu0 %v1781
        %v1783 = vpop.f32.mrf.mxu0
        %v1784 = vadd.f32 %v1674, %v1783
        %v1785 = vpop.f32.mrf.mxu0
        %v1786 = vadd.f32 %v1676, %v1785
        %1787 = vmatprep.mubr.f32.mxu0 0.0
        %v1788 = vand.u32 %v1028, 4294901760
        %1789 = vmatmul.mubr.f32.gmra.mxu0 %v1788
        %v1790 = vpop.f32.mrf.mxu0
        %v1791 = vadd.f32 %v1681, %v1790
        %v1792 = vpop.f32.mrf.mxu0
        %v1793 = vadd.f32 %v1683, %v1792
        %1794 = vdwg.mxu0
        %v1795 = vtanh.pop %v1763
        %v1796 = vtanh.pop %v1765
        %v1797 = vtanh.pop %v1770
        %v1798 = vtanh.pop %v1772
        %v1799 = vtanh.pop %v1777
        %v1800 = vtanh.pop %v1779
        %v1801 = vtanh.pop %v1784
        %v1802 = vtanh.pop %v1786
        %v1803 = vtanh.pop %v1791
        %v1804 = vtanh.pop %v1793
        %1806 = vset.pattern.permute.xlu0 0
        %1807 = vperm.xlu0 %1806, %v294
        %v1808 = vpop.permute.xlu0 %1807
        %1811 = vset.pattern.permute.xlu0 0
        %1812 = vperm.xlu0 %1811, %v295
        %v1813 = vpop.permute.xlu0 %1812
        %1816 = vset.pattern.permute.xlu0 0
        %1817 = vperm.xlu0 %1816, %v296
        %v1818 = vpop.permute.xlu0 %1817
        %1821 = vset.pattern.permute.xlu0 0
        %1822 = vperm.xlu0 %1821, %v297
        %v1823 = vpop.permute.xlu0 %1822
        %1826 = vset.pattern.permute.xlu0 0
        %1827 = vperm.xlu0 %1826, %v298
        %v1828 = vpop.permute.xlu0 %1827
        %v1830 = vmul.f32 %v1808, %v1795
        %v1831 = vmul.f32 %v1808, %v1796
        %v1832 = vmul.f32 %v1813, %v1797
        %v1833 = vmul.f32 %v1813, %v1798
        %v1834 = vmul.f32 %v1818, %v1799
        %v1835 = vmul.f32 %v1818, %v1800
        %v1836 = vmul.f32 %v1823, %v1801
        %v1837 = vmul.f32 %v1823, %v1802
        %v1838 = vmul.f32 %v1828, %v1803
        %v1839 = vmul.f32 %v1828, %v1804
        %v1840 = vadd.f32 %v1830, %v1832
        %v1841 = vadd.f32 %v1840, %v1834
        %v1842 = vadd.f32 %v1841, %v1836
        %v1843 = vadd.f32 %v1842, %v1838
        %v1844 = vrot.slane %v1843, 4
        %v1845 = vadd.f32 %v1843, %v1844
        %v1846 = vrot.slane %v1845, 2
        %v1847 = vadd.f32 %v1845, %v1846
        %v1848 = vrot.slane %v1847, 1
        %v1849 = vadd.f32 %v1847, %v1848
        %v1850 = vadd.f32 %v1831, %v1833
        %v1851 = vadd.f32 %v1850, %v1835
        %v1852 = vadd.f32 %v1851, %v1837
        %v1853 = vadd.f32 %v1852, %v1839
        %v1854 = vrot.slane %v1853, 4
        %v1855 = vadd.f32 %v1853, %v1854
        %v1856 = vrot.slane %v1855, 2
        %v1857 = vadd.f32 %v1855, %v1856
        %v1858 = vrot.slane %v1857, 1
        %v1859 = vadd.f32 %v1857, %v1858
        %1861 = vset.pattern.permute.xlu0 0
        %1862 = vperm.xlu0 %1861, %v299
        %v1863 = vpop.permute.xlu0 %1862
        %v1865 = vlaneseq
        %v1866 = vshrl.u32 %v1865, 7
        %v1867 = vsub.s32 0, %v1866
        %v1868 = vrot.slane %v1863, %v1867
        %v1869 = vadd.f32 %v1849, %v1868
        %v1870 = vadd.f32 %v1859, %v1868
        %v1873 = vcombine.low %v1869, %v1870
        %v1875 = vunpack.c.l.s4 1966171168
        %v1876 = vunpack.c.0.s8 %v1875
        %v1877 = vlaneseq
        %v1878 = vshrl.u32 %v1877, 7
        %v1879 = vsub.s32 %v1876, %v1878
        %v1880 = vrot.slane %v1873, %v1879
        %v1882 = vunpack.c.l.s4 1966171168
        %v1883 = vunpack.c.0.s8 %v1882
        %v1884 = vlaneseq
        %v1885 = vshrl.u32 %v1884, 7
        %v1886 = vsub.s32 %v1883, %v1885
        %v1887 = vrot.slane %v1880, %v1886
        %v1889 = vlaneseq
        %vm1890 = vcmp.ge.s32.totalorder %v1889, 0
        %vm1891 = vcmp.lt.s32.totalorder %v1889, 256
        %vm1892 = vmand %vm1890, %vm1891
        %1893 = vst.msk [vmem:[%s259] sm:$0x3] %vm1892, %v1887
        %s1894 = sand.u32 %s161, 1
        %s1895 = scalar_lea.sflag [#allocation4], %s1894
        %s1896 = sand.u32 %s161, 1
        %s1897 = smul.addr %s1896, 2
        %s1898 = scalar_lea.vmem [#allocation3], %s1897
        // Predicated region
        $region45: #{dnn_forward.1} parent=43 // pred_check
          %p1899 = pneg %p171
        $region46: #{dnn_forward.1} parent=43 // pred_check_branch
          %1901 = sbr.rel (%p1899) target = $region48
        $region47: #{dnn_forward.1} parent=43 // pred_region
          %s1902 = smul.u32 2, %s22
          %s1903 = ssub.s32 3, %s1902
          %p1904 = scmp.lt.s32.totalorder %s1903, 2
          %s1905 = scalar_select %p1904, %s1903, 2
          %s1906 = smul.u32 16, %s1905
          %s1908 = ssub.s32 32, %s1906
          %1909 = vsyncadd %s1895, %s1908
          %p1910 = scmp.ne.s32.totalorder 0, %s1906
          %s1911 = smul.addr %s1902, 16
          %s1912 = scalar_lea.hbm %s6, %s1911
          %s1913 = sshll.u32 %s1905, 4
          %s1914 = sshll.u32 %s1898, 4
          %s1915 = int_to_ptr.vmem [resolvable:$true] %s1914
          %1917 = dma.vmem_to_hbm [thread:$0]  (%p1910), %s1915, %s1913, %s1912, %s1895
        $region48: #{dnn_forward.1} parent=43 // pred_fallthru
          _
      $region44: #{dnn_forward.1} parent=5 // pred_fallthru
        _
      %p1918 = scmp.le.s32.totalorder 2, %s17
      // Predicated region
      $region49: #{dnn_forward.1} parent=5 // pred_check
        %p1919 = pneg %p1918
      $region50: #{dnn_forward.1} parent=5 // pred_check_branch
        %1921 = sbr.rel (%p1919) target = $region52
      $region51: #{dnn_forward.1} parent=5 // pred_region
        %s1922 = ssub.s32 %s17, 2
        // Predicated region
        $region53: #{dnn_forward.1} parent=51 // pred_check
          %p1923 = pneg %p177
        $region54: #{dnn_forward.1} parent=51 // pred_check_branch
          %1925 = sbr.rel (%p1923) target = $region56
        $region55: #{dnn_forward.1} parent=51 // pred_region
          %s1926 = sand.u32 %s162, 1
          %s1927 = scalar_lea.sflag [#allocation4], %s1926
          %s1928 = sand.u32 %s162, 1
          %s1929 = smul.addr %s1928, 2
          %s1930 = scalar_lea.vmem [#allocation3], %s1929
          %1931 = dma.done %s1927, 32
        $region56: #{dnn_forward.1} parent=51 // pred_fallthru
          _
      $region52: #{dnn_forward.1} parent=5 // pred_fallthru
        _
    $region6: #{dnn_forward.1} parent=1 // loop_footer
      %s21 = sadd.s32 1, %s17
    $region7: #{dnn_forward.1} parent=1 // loop_footer_branch
      %16 = sbr.rel target = $region3
    $region8: #{dnn_forward.1} parent=1 // loop_exit
      _
    %1932 = vsyncpa [#allocation4], 1
    %s1933 = scalar_lea.sflag [#allocation4], 1
    %1934 = vsyncpa %s1933, 1

</llo_original>
